<compile_context>
chip_gen: v5e
topology: v5e:2x2
jax: 0.10.0
libtpu: 0.0.40
codegen_flags: <defaults>
</compile_context>

<pallas_src>
import functools

import jax
import jax.numpy as jnp
from jax.experimental import pallas as pl
from jax.experimental.pallas import tpu as pltpu

BN_EPS = 1e-5       # nn.BatchNorm default eps (affine=False, training-mode batch stats)
NORM_EPS = 1e-12    # F.normalize default eps


# ---------------------------------------------------------------------------
# Image head: conv1x1(2048->Hd) -> BN2d -> ReLU -> [avgpool] -> conv1x1(Hd->P)
# (avgpool commuted ahead of the 2nd conv, which is linear)
# ---------------------------------------------------------------------------
def proj_v_kernel(x_ref, w1t_ref, w2t_ref, out_ref,
                  sum_ref, ssq_ref, hcache_ref, pool_ref,
                  *, s_per_batch, inv_m):
    """grid = (2, nb): phase 0 = conv1 + BN stats (+ cache h), phase 1 = apply + pool.

    x_ref    : (tile_m, 2048) bf16  tile_m = tile_b * H*W rows of NHWC-flattened x
    w1t_ref  : (2048, Hd)     bf16  resident
    w2t_ref  : (Hd, P)        bf16  resident
    out_ref  : (B, P)         f32   resident, written once at the last grid step
    sum_ref / ssq_ref : (1, Hd) f32 running per-channel sum / sum-of-squares
    hcache_ref: (B*H*W, Hd)  bf16   conv1 activation cache (phase 0 -> phase 1)
    pool_ref : (B, Hd)        f32   per-batch pooled ReLU(BN(h))
    """
    phase = pl.program_id(0)
    i = pl.program_id(1)
    nb = pl.num_programs(1)

    tile_m = x_ref.shape[0]
    hd = w1t_ref.shape[1]
    tile_b = tile_m // s_per_batch

    @pl.when(phase == 0)
    def _stats():
        @pl.when(i == 0)
        def _init():
            sum_ref[...] = jnp.zeros_like(sum_ref)
            ssq_ref[...] = jnp.zeros_like(ssq_ref)

        # 1x1 Conv2d(2048 -> Hd, bias=False) == (tile_m, C) @ (C, Hd) on the MXU
        # (bf16 in, f32 acc). Runs exactly once per row tile.
        h = jnp.dot(x_ref[...], w1t_ref[...], preferred_element_type=jnp.float32)
        sum_ref[...] += jnp.sum(h, axis=0, keepdims=True)
        ssq_ref[...] += jnp.sum(h * h, axis=0, keepdims=True)
        # Cache conv1 activations (bf16) so phase 1 never re-runs the matmul and
        # never touches x again. (bf16 cache vs f32 stats: sub-1e-2 relative drift.)
        hcache_ref[pl.ds(i * tile_m, tile_m), :] = h.astype(jnp.bfloat16)

    @pl.when(phase == 1)
    def _apply():
        mean = sum_ref[...] * inv_m                              # (1, Hd)
        # biased (training-mode) variance; clamp single-pass cancellation at 0.
        var = jnp.maximum(ssq_ref[...] * inv_m - mean * mean, 0.0)
        inv_std = jax.lax.rsqrt(var + BN_EPS)

        h = hcache_ref[pl.ds(i * tile_m, tile_m), :].astype(jnp.float32)
        r = jnp.maximum((h - mean) * inv_std, 0.0)               # BN + ReLU, f32

        # AdaptiveAvgPool2d((1,1)): mean over each batch's H*W rows.
        if s_per_batch % 8 == 0:
            # Sublane-aligned: free reshape + cheap sublane reduction.
            pooled = jnp.mean(r.reshape(tile_b, s_per_batch, hd), axis=1)
        else:
            # S not a multiple of 8 (e.g. 7x7=49): avoid the reshape crossing (8,128)
            # sublane-tile boundaries; reduce per-batch static slices instead.
            pooled = jnp.concatenate(
                [jnp.mean(r[b * s_per_batch:(b + 1) * s_per_batch], axis=0,
                          keepdims=True)
                 for b in range(tile_b)], axis=0)
        pool_ref[pl.ds(i * tile_b, tile_b), :] = pooled

        @pl.when(i == nb - 1)
        def _final():
            # 2nd 1x1 conv on pooled (B, Hd) rows — one full-size MXU matmul.
            out_ref[...] = jnp.dot(pool_ref[...].astype(jnp.bfloat16), w2t_ref[...],
                                   preferred_element_type=jnp.float32)


# ---------------------------------------------------------------------------
# Text head: conv1d(768->Hd) -> BN1d -> ReLU -> conv1d(Hd->P) -> L2 normalize.
# BN stats come from ALL B*L tokens; the projection / normalize is applied only
# to the CLS rows (the only rows the module returns), in ONE step at the end.
# ---------------------------------------------------------------------------
def proj_t_kernel(t2d_ref, tcls_ref, w1t_ref, w2t_ref, out_ref,
                  sum_ref, ssq_ref, *, inv_m):
    """grid = (nb,): every step accumulates BN stats over a token tile; the last
    step additionally projects + normalizes all B CLS rows at once.

    t2d_ref : (tile_b*L, 768) bf16  token tile (batch-aligned, streamed)
    tcls_ref: (B, 768)        bf16  all CLS rows, resident
    w1t_ref : (768, Hd)       bf16  resident
    w2t_ref : (Hd, P)         bf16  resident
    out_ref : (B, P)          f32   resident (normalized CLS projections)
    sum_ref / ssq_ref : (1, Hd) f32
    """
    i = pl.program_id(0)
    nb = pl.num_programs(0)

    @pl.when(i == 0)
    def _init():
        sum_ref[...] = jnp.zeros_like(sum_ref)
        ssq_ref[...] = jnp.zeros_like(ssq_ref)

    # BN1d statistics over all tokens (training-mode batch statistics).
    h = jnp.dot(t2d_ref[...], w1t_ref[...], preferred_element_type=jnp.float32)
    sum_ref[...] += jnp.sum(h, axis=0, keepdims=True)
    ssq_ref[...] += jnp.sum(h * h, axis=0, keepdims=True)

    @pl.when(i == nb - 1)
    def _apply():
        mean = sum_ref[...] * inv_m
        var = jnp.maximum(ssq_ref[...] * inv_m - mean * mean, 0.0)
        inv_std = jax.lax.rsqrt(var + BN_EPS)
        # All B CLS rows at once: one (B,768)@(768,Hd) and one (B,Hd)@(Hd,P).
        hc = jnp.dot(tcls_ref[...], w1t_ref[...], preferred_element_type=jnp.float32)
        r = jnp.maximum((hc - mean) * inv_std, 0.0)
        y = jnp.dot(r.astype(jnp.bfloat16), w2t_ref[...],
                    preferred_element_type=jnp.float32)           # (B, P)
        ssq = jnp.sum(y * y, axis=-1, keepdims=True)
        # F.normalize(dim=-1): y / max(||y||, eps) == y * rsqrt(max(sum_sq, eps^2))
        out_ref[...] = y * jax.lax.rsqrt(jnp.maximum(ssq, NORM_EPS * NORM_EPS))


# ---------------------------------------------------------------------------
# Wrappers
# ---------------------------------------------------------------------------
def _choose_tile_batches(batch, rows_per_batch, target_rows=1024):
    """Pick tile_b dividing batch so (tile_b*rows) is a legal, ~1024-row block."""
    cand = max(1, min(batch, max(1, target_rows // max(rows_per_batch, 1))))
    for tb in range(cand, 0, -1):
        if batch % tb == 0 and (tb == batch or (tb * rows_per_batch) % 8 == 0):
            return tb
    return batch   # full-dim block is always legal


def _vmem_limit(needed_bytes):
    # Scoped-VMEM defaults are 16 MiB (v5e) / 32 MiB (v6e/v7x); v7x physical VMEM is
    # only 64 MiB, so request what the budget needs (+headroom) capped at 48 MiB.
    return int(min(48 << 20, max(32 << 20, (needed_bytes * 5) // 4 + (4 << 20))))


def _proj_v_call(x_flat, w1t, w2t, batch, s_per_batch):
    m, c = x_flat.shape
    hd = w1t.shape[1]
    p = w2t.shape[1]
    tile_b = _choose_tile_batches(batch, s_per_batch)
    tile_m = tile_b * s_per_batch
    nb = batch // tile_b

    def x_index_map(ph, i):
        # Phase 0: stream row-tile i. Phase 1: pin to the last-fetched block so no x
        # DMAs are issued while the kernel works out of the VMEM h-cache.
        return (i * (1 - ph) + (nb - 1) * ph, 0)

    grid_spec = pltpu.PrefetchScalarGridSpec(
        num_scalar_prefetch=0,
        grid=(2, nb),                                             # (phase, row-tile)
        in_specs=[
            pl.BlockSpec((tile_m, c), x_index_map),               # streamed once
            pl.BlockSpec((c, hd), lambda ph, i: (0, 0)),          # resident weight
            pl.BlockSpec((hd, p), lambda ph, i: (0, 0)),          # resident weight
        ],
        out_specs=pl.BlockSpec((batch, p), lambda ph, i: (0, 0)),  # resident
        scratch_shapes=[
            pltpu.VMEM((1, hd), jnp.float32),                     # column sum
            pltpu.VMEM((1, hd), jnp.float32),                     # column sum of squares
            pltpu.VMEM((m, hd), jnp.bfloat16),                    # conv1 activation cache
            pltpu.VMEM((batch, hd), jnp.float32),                 # pooled activations
        ],
    )
    # VMEM budget: x double-buffer + (weights x2 buffers) + h cache + pool + out.
    needed = (2 * tile_m * c * 2 + 2 * (c * hd + hd * p) * 2
              + m * hd * 2 + batch * hd * 4 + 2 * batch * p * 4)
    kernel = functools.partial(proj_v_kernel, s_per_batch=s_per_batch, inv_m=1.0 / m)
    return pl.pallas_call(
        kernel,
        out_shape=jax.ShapeDtypeStruct((batch, p), jnp.float32),
        grid_spec=grid_spec,
        # Both axes carry cross-step state (phase ordering + shared-scratch accumulation),
        # so neither may be core-parallel without per-core partial accumulators.
        compiler_params=pltpu.CompilerParams(
            dimension_semantics=("arbitrary", "arbitrary"),
            vmem_limit_bytes=_vmem_limit(needed)),
    )(x_flat, w1t, w2t)


def _proj_t_call(t2d, t_cls, w1t, w2t, batch, seq_len):
    mt, ct = t2d.shape
    hd = w1t.shape[1]
    p = w2t.shape[1]
    tile_b = _choose_tile_batches(batch, seq_len)
    tile_m = tile_b * seq_len
    nb = batch // tile_b

    grid_spec = pltpu.PrefetchScalarGridSpec(
        num_scalar_prefetch=0,
        grid=(nb,),
        in_specs=[
            pl.BlockSpec((tile_m, ct), lambda i: (i, 0)),         # token tiles, streamed
            pl.BlockSpec((batch, ct), lambda i: (0, 0)),          # resident CLS rows
            pl.BlockSpec((ct, hd), lambda i: (0, 0)),             # resident weight
            pl.BlockSpec((hd, p), lambda i: (0, 0)),              # resident weight
        ],
        out_specs=pl.BlockSpec((batch, p), lambda i: (0, 0)),
        scratch_shapes=[
            pltpu.VMEM((1, hd), jnp.float32),
            pltpu.VMEM((1, hd), jnp.float32),
        ],
    )
    needed = (2 * tile_m * ct * 2 + 2 * batch * ct * 2
              + 2 * (ct * hd + hd * p) * 2 + 2 * batch * p * 4)
    kernel = functools.partial(proj_t_kernel, inv_m=1.0 / mt)
    return pl.pallas_call(
        kernel,
        out_shape=jax.ShapeDtypeStruct((batch, p), jnp.float32),
        grid_spec=grid_spec,
        compiler_params=pltpu.CompilerParams(
            dimension_semantics=("arbitrary",),
            vmem_limit_bytes=_vmem_limit(needed)),
    )(t2d, t_cls, w1t, w2t)


def pendingmodel_forward(img_emb, text_emb, params):
    """Reproduces Pendingmodel.forward's returned dict given encoder / LM outputs."""
    b, c, h, w = img_emb.shape
    s = h * w
    _, seq_len, ct = text_emb.shape

    # ---- image path: NCHW -> (B*H*W, C) rows, bf16 (half the DMA bytes) ----
    # TODO(synk): this transpose is one extra XLA HBM pass; an in-kernel NCHW
    # contraction would shrink the matmul's N dim to H*W and starve the MXU, so the
    # transpose is kept (see header note).
    x_flat = jnp.transpose(img_emb.astype(jnp.bfloat16), (0, 2, 3, 1)).reshape(b * s, c)
    w_v1t = params["w_v1"].T.astype(jnp.bfloat16)   # (2048, Hd)
    w_v2t = params["w_v2"].T.astype(jnp.bfloat16)   # (Hd, P)
    proj_img_emb_pool = _proj_v_call(x_flat, w_v1t, w_v2t, batch=b, s_per_batch=s)

    # ---- text path: all tokens for BN stats, CLS rows for the projected output ----
    t2d = text_emb.astype(jnp.bfloat16).reshape(b * seq_len, ct)   # free reshape
    t_cls = text_emb[:, 0, :].astype(jnp.bfloat16)                 # (B, 768)
    w_t1t = params["w_t1"].T.astype(jnp.bfloat16)   # (768, Hd)
    w_t2t = params["w_t2"].T.astype(jnp.bfloat16)   # (Hd, P)
    proj_text_cls = _proj_t_call(t2d, t_cls, w_t1t, w_t2t, batch=b, seq_len=seq_len)

    # NOTE: the per-patch normalized proj_img_emb computed in the PyTorch forward is
    # dead code (never returned), so it is skipped here.
    return {
        "img_emb": img_emb,
        "proj_img_emb": proj_img_emb_pool,   # pooled, un-normalized (matches torch)
        "patch_emb": None,
        "proj_text_emb": proj_text_cls,      # CLS token, projected & L2-normalized
        "word_emb": None,
    }


def init_params(key, proj_hidden, proj_out):
    k1, k2, k3, k4 = jax.random.split(key, 4)
    scale = 0.02
    return {
        # Conv2d(2048 -> hidden, 1x1, bias=False): weight (hidden, 2048)
        "w_v1": scale * jax.random.normal(k1, (proj_hidden, 2048), jnp.float32),
        # Conv2d(hidden -> proj_out, 1x1, bias=False): weight (proj_out, hidden)
        "w_v2": scale * jax.random.normal(k2, (proj_out, proj_hidden), jnp.float32),
        # Conv1d(768 -> hidden, k=1, bias=False): weight (hidden, 768)
        "w_t1": scale * jax.random.normal(k3, (proj_hidden, 768), jnp.float32),
        # Conv1d(hidden -> proj_out, k=1, bias=False): weight (proj_out, hidden)
        "w_t2": scale * jax.random.normal(k4, (proj_out, proj_hidden), jnp.float32),
    }


if __name__ == "__main__":
    key = jax.random.PRNGKey(0)
    k_img, k_txt, k_par = jax.random.split(key, 3)

    B, H, W = 2, 4, 4          # encoder feature-map spatial size
    L = 8                      # text sequence length
    PROJ_HIDDEN, PROJ_OUT = 256, 128

    img_emb = jax.random.normal(k_img, (B, 2048, H, W), jnp.float32)   # ResNet50 output
    text_emb = jax.random.normal(k_txt, (B, L, 768), jnp.float32)      # LM last_hidden_state
    params = init_params(k_par, PROJ_HIDDEN, PROJ_OUT)

    out = pendingmodel_forward(img_emb, text_emb, params)
    jax.block_until_ready((out["img_emb"], out["proj_img_emb"], out["proj_text_emb"]))

    assert out["img_emb"].shape == (B, 2048, H, W)
    assert out["proj_img_emb"].shape == (B, PROJ_OUT)
    assert out["proj_text_emb"].shape == (B, PROJ_OUT)
    assert bool(jnp.all(jnp.isfinite(out["proj_img_emb"])))
    assert bool(jnp.all(jnp.isfinite(out["proj_text_emb"])))
    # F.normalize invariant: projected CLS text embeddings are unit-norm (f32 normalize).
    norms = jnp.linalg.norm(out["proj_text_emb"], axis=-1)
    assert bool(jnp.all(jnp.abs(norms - 1.0) < 1e-3))
    print("KERNEL_OK")
</pallas_src>

<mosaic_0001>
module attributes {stable_mosaic.version = 11 : i64} {
  func.func @proj_v_kernel(%arg0: i32, %arg1: i32, %arg2: memref<32x2048xbf16, #tpu.memory_space<vmem>>, %arg3: memref<2048x256xbf16, #tpu.memory_space<vmem>>, %arg4: memref<256x128xbf16, #tpu.memory_space<vmem>>, %arg5: memref<2x128xf32, #tpu.memory_space<vmem>>, %arg6: memref<1x256xf32, #tpu.memory_space<vmem>>, %arg7: memref<1x256xf32, #tpu.memory_space<vmem>>, %arg8: memref<32x256xbf16, #tpu.memory_space<vmem>>, %arg9: memref<2x256xf32, #tpu.memory_space<vmem>>) attributes {dimension_semantics = [#tpu.dimension_semantics<arbitrary>, #tpu.dimension_semantics<arbitrary>], iteration_bounds = array<i64: 2, 1>, scalar_prefetch = 0 : i64, scratch_operands = 4 : i64, tpu.core_type = #tpu.core_type<tc>, window_params = [{transform_indices = @transform_0, window_bounds = array<i64: 32, 2048>}, {pipeline_mode = #tpu.pipeline_mode<synchronous>, transform_indices = @transform_1, window_bounds = array<i64: 2048, 256>}, {pipeline_mode = #tpu.pipeline_mode<synchronous>, transform_indices = @transform_2, window_bounds = array<i64: 256, 128>}, {pipeline_mode = #tpu.pipeline_mode<synchronous>, transform_indices = @transform_3, window_bounds = array<i64: 2, 128>}]} {
    %c0_i32 = arith.constant 0 : i32
    %0 = arith.cmpi eq, %arg0, %c0_i32 : i32
    %1 = arith.extui %0 : i1 to i32
    %c0_i32_0 = arith.constant 0 : i32
    %2 = arith.cmpi ne, %1, %c0_i32_0 : i32
    scf.if %2 {
      %c0_i32_2 = arith.constant 0 : i32
      %6 = arith.cmpi eq, %arg1, %c0_i32_2 : i32
      %7 = arith.extui %6 : i1 to i32
      %c0_i32_3 = arith.constant 0 : i32
      %8 = arith.cmpi ne, %7, %c0_i32_3 : i32
      scf.if %8 {
        %cst_18 = arith.constant 0.000000e+00 : f32
        %27 = vector.broadcast %cst_18 : f32 to vector<1x256xf32>
        %c0_19 = arith.constant 0 : index
        %c0_20 = arith.constant 0 : index
        %28 = vector.load %arg6[%c0_19, %c0_20] : memref<1x256xf32, #tpu.memory_space<vmem>>, vector<1x256xf32>
        tpu.vector_store %arg6[%c0_19, %c0_20], %27 {strides = array<i32>} : memref<1x256xf32, #tpu.memory_space<vmem>>, vector<1x256xf32>,
        %cst_21 = arith.constant 0.000000e+00 : f32
        %29 = vector.broadcast %cst_21 : f32 to vector<1x256xf32>
        %c0_22 = arith.constant 0 : index
        %c0_23 = arith.constant 0 : index
        %30 = vector.load %arg7[%c0_22, %c0_23] : memref<1x256xf32, #tpu.memory_space<vmem>>, vector<1x256xf32>
        tpu.vector_store %arg7[%c0_22, %c0_23], %29 {strides = array<i32>} : memref<1x256xf32, #tpu.memory_space<vmem>>, vector<1x256xf32>,
      } else {
      }
      %c0 = arith.constant 0 : index
      %c0_4 = arith.constant 0 : index
      %9 = vector.load %arg2[%c0, %c0_4] : memref<32x2048xbf16, #tpu.memory_space<vmem>>, vector<32x2048xbf16>
      %c0_5 = arith.constant 0 : index
      %c0_6 = arith.constant 0 : index
      %10 = vector.load %arg3[%c0_5, %c0_6] : memref<2048x256xbf16, #tpu.memory_space<vmem>>, vector<2048x256xbf16>
      %cst = arith.constant dense<0.000000e+00> : vector<32x256xf32>
      %11 = tpu.matmul %9, %10, %cst {dimension_numbers = #tpu.dot_dimension_numbers<[1], [0], [0], [1], [0, 0, 1, 1], [], []>} : vector<32x2048xbf16>, vector<2048x256xbf16>, vector<32x256xf32> -> vector<32x256xf32>
      %c0_7 = arith.constant 0 : index
      %c0_8 = arith.constant 0 : index
      %12 = vector.load %arg6[%c0_7, %c0_8] : memref<1x256xf32, #tpu.memory_space<vmem>>, vector<1x256xf32>
      %cst_9 = arith.constant dense<0.000000e+00> : vector<256xf32>
      %13 = vector.multi_reduction <add>, %11, %cst_9 [0] : vector<32x256xf32> to vector<256xf32>
      %14 = vector.shape_cast %13 : vector<256xf32> to vector<1x256xf32>
      %15 = arith.addf %12, %14 : vector<1x256xf32>
      %c0_10 = arith.constant 0 : index
      %c0_11 = arith.constant 0 : index
      %16 = vector.load %arg6[%c0_10, %c0_11] : memref<1x256xf32, #tpu.memory_space<vmem>>, vector<1x256xf32>
      tpu.vector_store %arg6[%c0_10, %c0_11], %15 {strides = array<i32>} : memref<1x256xf32, #tpu.memory_space<vmem>>, vector<1x256xf32>,
      %c0_12 = arith.constant 0 : index
      %c0_13 = arith.constant 0 : index
      %17 = vector.load %arg7[%c0_12, %c0_13] : memref<1x256xf32, #tpu.memory_space<vmem>>, vector<1x256xf32>
      %18 = arith.mulf %11, %11 : vector<32x256xf32>
      %cst_14 = arith.constant dense<0.000000e+00> : vector<256xf32>
      %19 = vector.multi_reduction <add>, %18, %cst_14 [0] : vector<32x256xf32> to vector<256xf32>
      %20 = vector.shape_cast %19 : vector<256xf32> to vector<1x256xf32>
      %21 = arith.addf %17, %20 : vector<1x256xf32>
      %c0_15 = arith.constant 0 : index
      %c0_16 = arith.constant 0 : index
      %22 = vector.load %arg7[%c0_15, %c0_16] : memref<1x256xf32, #tpu.memory_space<vmem>>, vector<1x256xf32>
      tpu.vector_store %arg7[%c0_15, %c0_16], %21 {strides = array<i32>} : memref<1x256xf32, #tpu.memory_space<vmem>>, vector<1x256xf32>,
      %23 = arith.truncf %11 : vector<32x256xf32> to vector<32x256xbf16>
      %c32_i32 = arith.constant 32 : i32
      %24 = arith.muli %arg1, %c32_i32 : i32
      %25 = arith.index_cast %24 : i32 to index
      %c0_17 = arith.constant 0 : index
      %26 = vector.load %arg8[%25, %c0_17] : memref<32x256xbf16, #tpu.memory_space<vmem>>, vector<32x256xbf16>
      tpu.vector_store %arg8[%25, %c0_17], %23 {strides = array<i32>} : memref<32x256xbf16, #tpu.memory_space<vmem>>, vector<32x256xbf16>,
    } else {
    }
    %c1_i32 = arith.constant 1 : i32
    %3 = arith.cmpi eq, %arg0, %c1_i32 : i32
    %4 = arith.extui %3 : i1 to i32
    %c0_i32_1 = arith.constant 0 : i32
    %5 = arith.cmpi ne, %4, %c0_i32_1 : i32
    scf.if %5 {
      %c0 = arith.constant 0 : index
      %c0_2 = arith.constant 0 : index
      %6 = vector.load %arg6[%c0, %c0_2] : memref<1x256xf32, #tpu.memory_space<vmem>>, vector<1x256xf32>
      %cst = arith.constant 3.125000e-02 : f32
      %7 = vector.broadcast %cst : f32 to vector<1x256xf32>
      %8 = arith.mulf %6, %7 : vector<1x256xf32>
      %c0_3 = arith.constant 0 : index
      %c0_4 = arith.constant 0 : index
      %9 = vector.load %arg7[%c0_3, %c0_4] : memref<1x256xf32, #tpu.memory_space<vmem>>, vector<1x256xf32>
      %cst_5 = arith.constant 3.125000e-02 : f32
      %10 = vector.broadcast %cst_5 : f32 to vector<1x256xf32>
      %11 = arith.mulf %9, %10 : vector<1x256xf32>
      %12 = arith.mulf %8, %8 : vector<1x256xf32>
      %13 = arith.subf %11, %12 : vector<1x256xf32>
      %cst_6 = arith.constant 0.000000e+00 : f32
      %14 = vector.broadcast %cst_6 : f32 to vector<1x256xf32>
      %15 = arith.maximumf %13, %14 : vector<1x256xf32>
      %cst_7 = arith.constant 9.99999974E-6 : f32
      %16 = vector.broadcast %cst_7 : f32 to vector<1x256xf32>
      %17 = arith.addf %15, %16 : vector<1x256xf32>
      %18 = math.rsqrt %17 : vector<1x256xf32>
      %c32_i32 = arith.constant 32 : i32
      %19 = arith.muli %arg1, %c32_i32 : i32
      %20 = arith.index_cast %19 : i32 to index
      %c0_8 = arith.constant 0 : index
      %21 = vector.load %arg8[%20, %c0_8] : memref<32x256xbf16, #tpu.memory_space<vmem>>, vector<32x256xbf16>
      %22 = arith.extf %21 : vector<32x256xbf16> to vector<32x256xf32>
      %23 = vector.broadcast %8 : vector<1x256xf32> to vector<32x256xf32>
      %24 = arith.subf %22, %23 : vector<32x256xf32>
      %25 = vector.broadcast %18 : vector<1x256xf32> to vector<32x256xf32>
      %26 = arith.mulf %24, %25 : vector<32x256xf32>
      %cst_9 = arith.constant 0.000000e+00 : f32
      %27 = vector.broadcast %cst_9 : f32 to vector<32x256xf32>
      %28 = arith.maximumf %26, %27 : vector<32x256xf32>
      %29 = vector.shape_cast %28 : vector<32x256xf32> to vector<2x16x256xf32>
      %cst_10 = arith.constant dense<0.000000e+00> : vector<2x256xf32>
      %30 = vector.multi_reduction <add>, %29, %cst_10 [1] : vector<2x16x256xf32> to vector<2x256xf32>
      %cst_11 = arith.constant 1.600000e+01 : f32
      %31 = vector.broadcast %cst_11 : f32 to vector<2x256xf32>
      %32 = arith.divf %30, %31 : vector<2x256xf32>
      %c2_i32 = arith.constant 2 : i32
      %33 = arith.muli %arg1, %c2_i32 : i32
      %34 = arith.index_cast %33 : i32 to index
      %c0_12 = arith.constant 0 : index
      %35 = vector.load %arg9[%34, %c0_12] : memref<2x256xf32, #tpu.memory_space<vmem>>, vector<2x256xf32>
      tpu.vector_store %arg9[%34, %c0_12], %32 {strides = array<i32>} : memref<2x256xf32, #tpu.memory_space<vmem>>, vector<2x256xf32>,
      %c0_i32_13 = arith.constant 0 : i32
      %36 = arith.cmpi eq, %arg1, %c0_i32_13 : i32
      %37 = arith.extui %36 : i1 to i32
      %c0_i32_14 = arith.constant 0 : i32
      %38 = arith.cmpi ne, %37, %c0_i32_14 : i32
      scf.if %38 {
        %c0_15 = arith.constant 0 : index
        %c0_16 = arith.constant 0 : index
        %39 = vector.load %arg9[%c0_15, %c0_16] : memref<2x256xf32, #tpu.memory_space<vmem>>, vector<2x256xf32>
        %40 = arith.truncf %39 : vector<2x256xf32> to vector<2x256xbf16>
        %c0_17 = arith.constant 0 : index
        %c0_18 = arith.constant 0 : index
        %41 = vector.load %arg4[%c0_17, %c0_18] : memref<256x128xbf16, #tpu.memory_space<vmem>>, vector<256x128xbf16>
        %cst_19 = arith.constant dense<0.000000e+00> : vector<2x128xf32>
        %42 = tpu.matmul %40, %41, %cst_19 {dimension_numbers = #tpu.dot_dimension_numbers<[1], [0], [0], [1], [0, 0, 1, 1], [], []>} : vector<2x256xbf16>, vector<256x128xbf16>, vector<2x128xf32> -> vector<2x128xf32>
        %c0_20 = arith.constant 0 : index
        %c0_21 = arith.constant 0 : index
        %43 = vector.load %arg5[%c0_20, %c0_21] : memref<2x128xf32, #tpu.memory_space<vmem>>, vector<2x128xf32>
        tpu.vector_store %arg5[%c0_20, %c0_21], %42 {strides = array<i32>} : memref<2x128xf32, #tpu.memory_space<vmem>>, vector<2x128xf32>,
      } else {
      }
    } else {
    }
    return
  }
  func.func @transform_0(%arg0: i32, %arg1: i32) -> (i32, i32) {
    %c1_i32 = arith.constant 1 : i32
    %0 = arith.subi %c1_i32, %arg0 : i32
    %1 = arith.muli %arg1, %0 : i32
    %c0_i32 = arith.constant 0 : i32
    %2 = arith.muli %c0_i32, %arg0 : i32
    %3 = arith.addi %1, %2 : i32
    %c0_i32_0 = arith.constant 0 : i32
    %c0_i32_1 = arith.constant 0 : i32
    return %3, %c0_i32_0 : i32, i32
  }
  func.func @transform_1(%arg0: i32, %arg1: i32) -> (i32, i32) {
    %c0_i32 = arith.constant 0 : i32
    %c0_i32_0 = arith.constant 0 : i32
    %c0_i32_1 = arith.constant 0 : i32
    return %c0_i32, %c0_i32_0 : i32, i32
  }
  func.func @transform_2(%arg0: i32, %arg1: i32) -> (i32, i32) {
    %c0_i32 = arith.constant 0 : i32
    %c0_i32_0 = arith.constant 0 : i32
    %c0_i32_1 = arith.constant 0 : i32
    return %c0_i32, %c0_i32_0 : i32, i32
  }
  func.func @transform_3(%arg0: i32, %arg1: i32) -> (i32, i32) {
    %c0_i32 = arith.constant 0 : i32
    %c0_i32_0 = arith.constant 0 : i32
    %c0_i32_1 = arith.constant 0 : i32
    return %c0_i32, %c0_i32_0 : i32, i32
  }
}

</mosaic_0001>

<llo_original>
// kernel: tpu_custom_call.1
$region0: #{tpu_custom_call.1}
  #allocation0 [shape = 'u32[]', space=smem, size = 0x4, offset = 0x4, fixed_abs, tag = 'smem constant byte address 0x4 - core index']
  #allocation1 [shape = 'u32[72,128]{1,0:T(1,128)}', space=vmem, size = 0x9000, scoped, tag = 'internal scratch']
  #allocation2 [shape = 'f32[1,256]{1,0:T(1,128)}', space=vmem, size = 0x400, scoped, tag = 'scratch operand']
  #allocation3 [shape = 'f32[1,256]{1,0:T(1,128)}', space=vmem, size = 0x400, scoped, tag = 'scratch operand']
  #allocation4 [shape = 'bf16[32,256]{1,0:T(8,128)(2,1)}', space=vmem, size = 0x4000, scoped, tag = 'scratch operand']
  #allocation5 [shape = 'f32[2,256]{1,0:T(2,128)}', space=vmem, size = 0x800, scoped, tag = 'scratch operand']
  %s0 = inlined_call_operand.hbm [shape: bf16[32,2048], index: 0, kind: input, shape index: {}]
  %s1 = inlined_call_operand.hbm [shape: bf16[2048,256], index: 1, kind: input, shape index: {}]
  %s2 = inlined_call_operand.hbm [shape: bf16[256,128], index: 2, kind: input, shape index: {}]
  %s3 = inlined_call_operand.hbm [shape: f32[2,128], index: 3, kind: output, shape index: {}]
  %s4 = sld [smem:[#allocation0]]
  $region73: #{tpu_custom_call.1} parent=0
    _
  %s6 = ssub.s32 1, %s4
  %s7 = scalar_select 0, %s6, %s4
  $region1: #{tpu_custom_call.1} parent=0
    #allocation6 [shape = 'u8[262144]{0}', space=vmem, size = 0x40000, scoped, tag = 'input window, operand 0']
    #allocation7 [shape = 's32[2]{0}', space=sflag, size = 0x8, scoped, tag = 'scoped memory for tpu_custom_call.1']
    #allocation8 [shape = 's32[2]{0}', space=sflag, size = 0x8, scoped, tag = 'scoped memory for tpu_custom_call.1']
    #allocation9 [shape = 'u8[1048576]{0}', space=vmem, size = 0x100000, scoped, tag = 'input window, operand 1, single buffered']
    #allocation10 [shape = 's32[1]{0}', space=sflag, size = 0x4, scoped, tag = 'scoped memory for tpu_custom_call.1']
    #allocation11 [shape = 'u8[65536]{0}', space=vmem, size = 0x10000, scoped, tag = 'input window, operand 2, single buffered']
    #allocation12 [shape = 'u8[1024]{0}', space=vmem, size = 0x400, scoped, tag = 'output window, operand 0, single buffered']
    %8 = vsyncpa [#allocation7], 0
    %s9 = scalar_lea.sflag [#allocation7], 1
    %10 = vsyncpa %s9, 0
    %11 = vsyncpa [#allocation10], 0
    %12 = vsyncpa [#allocation8], 0
    loop: start=0, step=1, limit=4
    $region2: #{tpu_custom_call.1} parent=1 // loop_pre_header
      _
    $region3: #{tpu_custom_call.1} parent=1 // loop_header
      %s14 = sphi 0, %s18
      %p15 = scmp.ge.s32.totalorder %s14, 4
      %s21 = sphi 0, %s33
      %s22 = sphi 0, %s29
      %s23 = sphi 0, %s21
      %s24 = sphi 0, %s22
      %s25 = sphi 0, %s23
      %s26 = sphi 0, %s24
      %s40 = sphi 0, %s42
      %s43 = sphi 0, %s40
      %s44 = sphi 0, %s43
      %s60 = sphi 0, %s44
      %s64 = sphi 0, %s64
      %s66 = sphi 0, %s64
      %s67 = sphi 0, %s66
      %s81 = sphi 0, %s67
      %s85 = sphi 0, %s85
      %s87 = sphi 0, %s85
      %s88 = sphi 0, %s87
      %s102 = sphi 0, %s88
      %s106 = sphi 0, %s106
      %s108 = sphi 0, %s106
      %s109 = sphi 0, %s108
      %s123 = sphi 0, %s109
    $region4: #{tpu_custom_call.1} parent=1 // loop_header_branch
      %17 = sbr.rel (%p15) target = $region8
    $region5: #{tpu_custom_call.1} parent=1 // loop_body
      %s19 = ssub.s32 %s14, 1
      %s20 = ssub.s32 %s14, 2
      %s27 = sadd.s32 1, %s22
      %p28 = scmp.ge.s32.totalorder %s27, 1
      %s29 = scalar_select %p28, 0, %s27
      %s30 = sadd.s32 1, %s21
      %s31 = scalar_select %p28, %s30, %s21
      %p32 = scmp.ge.s32.totalorder %s31, 2
      %s33 = scalar_select %p32, 0, %s31
      %s34 = ssub.s32 1, %s21
      %s35 = smul.u32 %s22, %s34
      %s36 = ssub.s32 1, %s33
      %s37 = smul.u32 %s29, %s36
      %s38 = ssub.s32 %s35, %s37
      %p39 = scmp.eq.s32.totalorder %s38, 0
      %s41 = sadd.s32 %s40, 1
      %s42 = scalar_select %p39, %s40, %s41
      %p45 = pneg %p39
      %p46 = scmp.eq.s32.totalorder %s14, 1
      %p47 = por %p45, %p46
      %p48 = scmp.ne.s32.totalorder %s40, %s43
      %p49 = scmp.eq.s32.totalorder %s14, 0
      %p50 = por %p48, %p49
      %p51 = scmp.ne.s32.totalorder %s40, %s43
      %p52 = scmp.eq.s32.totalorder %s19, 1
      %p53 = por %p51, %p52
      %p54 = scmp.ne.s32.totalorder %s43, %s44
      %p55 = scmp.eq.s32.totalorder %s19, 0
      %p56 = por %p54, %p55
      %p57 = scmp.ne.s32.totalorder %s43, %s44
      %p58 = scmp.eq.s32.totalorder %s20, 1
      %p59 = por %p57, %p58
      %p61 = scmp.ne.s32.totalorder %s44, %s60
      %p62 = scmp.eq.s32.totalorder %s20, 0
      %p63 = por %p61, %p62
      %s65 = sadd.s32 %s64, 1
      %p68 = scmp.eq.s32.totalorder %s14, 1
      %p69 = scmp.ne.s32.totalorder %s64, %s66
      %p70 = scmp.eq.s32.totalorder %s14, 0
      %p71 = por %p69, %p70
      %p72 = scmp.ne.s32.totalorder %s64, %s66
      %p73 = scmp.eq.s32.totalorder %s19, 1
      %p74 = por %p72, %p73
      %p75 = scmp.ne.s32.totalorder %s66, %s67
      %p76 = scmp.eq.s32.totalorder %s19, 0
      %p77 = por %p75, %p76
      %p78 = scmp.ne.s32.totalorder %s66, %s67
      %p79 = scmp.eq.s32.totalorder %s20, 1
      %p80 = por %p78, %p79
      %p82 = scmp.ne.s32.totalorder %s67, %s81
      %p83 = scmp.eq.s32.totalorder %s20, 0
      %p84 = por %p82, %p83
      %s86 = sadd.s32 %s85, 1
      %p89 = scmp.eq.s32.totalorder %s14, 1
      %p90 = scmp.ne.s32.totalorder %s85, %s87
      %p91 = scmp.eq.s32.totalorder %s14, 0
      %p92 = por %p90, %p91
      %p93 = scmp.ne.s32.totalorder %s85, %s87
      %p94 = scmp.eq.s32.totalorder %s19, 1
      %p95 = por %p93, %p94
      %p96 = scmp.ne.s32.totalorder %s87, %s88
      %p97 = scmp.eq.s32.totalorder %s19, 0
      %p98 = por %p96, %p97
      %p99 = scmp.ne.s32.totalorder %s87, %s88
      %p100 = scmp.eq.s32.totalorder %s20, 1
      %p101 = por %p99, %p100
      %p103 = scmp.ne.s32.totalorder %s88, %s102
      %p104 = scmp.eq.s32.totalorder %s20, 0
      %p105 = por %p103, %p104
      %s107 = sadd.s32 %s106, 1
      %p110 = scmp.eq.s32.totalorder %s14, 1
      %p111 = scmp.ne.s32.totalorder %s106, %s108
      %p112 = scmp.eq.s32.totalorder %s14, 0
      %p113 = por %p111, %p112
      %p114 = scmp.ne.s32.totalorder %s106, %s108
      %p115 = scmp.eq.s32.totalorder %s19, 1
      %p116 = por %p114, %p115
      %p117 = scmp.ne.s32.totalorder %s108, %s109
      %p118 = scmp.eq.s32.totalorder %s19, 0
      %p119 = por %p117, %p118
      %p120 = scmp.ne.s32.totalorder %s108, %s109
      %p121 = scmp.eq.s32.totalorder %s20, 1
      %p122 = por %p120, %p121
      %p124 = scmp.ne.s32.totalorder %s109, %s123
      %p125 = scmp.eq.s32.totalorder %s20, 0
      %p126 = por %p124, %p125
      %p127 = scmp.le.s32.totalorder 1, %s14
      %p128 = scmp.lt.s32.totalorder %s14, 3
      %p129 = pnand %p127, %p128
      %p130 = pneg %p129
      // Predicated region
      $region9: #{tpu_custom_call.1} parent=5 // pred_check
        _
      $region10: #{tpu_custom_call.1} parent=5 // pred_check_branch
        %132 = sbr.rel (%p129) target = $region12
      $region11: #{tpu_custom_call.1} parent=5 // pred_region
        %s133 = ssub.s32 %s14, 1
        // Predicated region
        $region13: #{tpu_custom_call.1} parent=11 // pred_check
          %p134 = pneg %p77
        $region14: #{tpu_custom_call.1} parent=11 // pred_check_branch
          %136 = sbr.rel (%p134) target = $region16
        $region15: #{tpu_custom_call.1} parent=11 // pred_region
          %138 = vsyncadd [#allocation10], 0
          %s139 = sshll.u32 %s1, 4
          %s140 = int_to_ptr.hbm [resolvable:$true] %s139
          %s141 = sshll.u32 [#allocation9], 4
          %s142 = int_to_ptr.vmem [resolvable:$true] %s141
          %147 = dma.hbm_to_vmem [thread:$0]  %s140, 32768, %s142, [#allocation10], 128, 128, 8
        $region16: #{tpu_custom_call.1} parent=11 // pred_fallthru
          _
        // Predicated region
        $region17: #{tpu_custom_call.1} parent=11 // pred_check
          %p148 = pneg %p98
        $region18: #{tpu_custom_call.1} parent=11 // pred_check_branch
          %150 = sbr.rel (%p148) target = $region20
        $region19: #{tpu_custom_call.1} parent=11 // pred_region
          %152 = vsyncadd [#allocation10], 0
          %s153 = sshll.u32 %s2, 4
          %s154 = int_to_ptr.hbm [resolvable:$true] %s153
          %s155 = sshll.u32 [#allocation11], 4
          %s156 = int_to_ptr.vmem [resolvable:$true] %s155
          %161 = dma.hbm_to_vmem [thread:$0]  %s154, 2048, %s156, [#allocation10], 64, 64, 4
        $region20: #{tpu_custom_call.1} parent=11 // pred_fallthru
          _
      $region12: #{tpu_custom_call.1} parent=5 // pred_fallthru
        _
      %p162 = scmp.lt.s32.totalorder %s14, 2
      // Predicated region
      $region21: #{tpu_custom_call.1} parent=5 // pred_check
        %p163 = pneg %p162
      $region22: #{tpu_custom_call.1} parent=5 // pred_check_branch
        %165 = sbr.rel (%p163) target = $region24
      $region23: #{tpu_custom_call.1} parent=5 // pred_region
        // Predicated region
        $region25: #{tpu_custom_call.1} parent=23 // pred_check
          %p166 = pneg %p50
        $region26: #{tpu_custom_call.1} parent=23 // pred_check_branch
          %168 = sbr.rel (%p166) target = $region28
        $region27: #{tpu_custom_call.1} parent=23 // pred_region
          %s169 = sand.u32 %s40, 1
          %s170 = scalar_lea.sflag [#allocation7], %s169
          %s171 = sand.u32 %s40, 1
          %s172 = smul.addr %s171, 256
          %s173 = scalar_lea.vmem [#allocation6], %s172
          %s174 = ssub.s32 1, %s21
          %s175 = smul.u32 %s22, %s174
          %s176 = smul.u32 4, %s175
          %178 = vsyncadd %s170, 0
          %s179 = smul.addr %s176, 16
          %s180 = smul.addr %s179, 4
          %s181 = scalar_lea.hbm %s0, %s180
          %s182 = sshll.u32 %s181, 4
          %s183 = int_to_ptr.hbm [resolvable:$true] %s182
          %s184 = sshll.u32 %s173, 4
          %s185 = int_to_ptr.vmem [resolvable:$true] %s184
          %190 = dma.hbm_to_vmem [thread:$0]  %s183, 4096, %s185, %s170, 1024, 1024, 64
        $region28: #{tpu_custom_call.1} parent=23 // pred_fallthru
          _
      $region24: #{tpu_custom_call.1} parent=5 // pred_fallthru
        _
      %p191 = scmp.le.s32.totalorder 1, %s14
      %p192 = scmp.lt.s32.totalorder %s14, 3
      %p193 = pnand %p191, %p192
      %p194 = pneg %p193
      // Predicated region
      $region29: #{tpu_custom_call.1} parent=5 // pred_check
        _
      $region30: #{tpu_custom_call.1} parent=5 // pred_check_branch
        %196 = sbr.rel (%p193) target = $region32
      $region31: #{tpu_custom_call.1} parent=5 // pred_region
        %s197 = ssub.s32 %s14, 1
        %s198 = sand.u32 %s43, 1
        %s199 = scalar_lea.sflag [#allocation7], %s198
        %s200 = sand.u32 %s43, 1
        %s201 = smul.addr %s200, 256
        %s202 = scalar_lea.vmem [#allocation6], %s201
        // Predicated region
        $region33: #{tpu_custom_call.1} parent=31 // pred_check
          %p203 = pneg %p56
        $region34: #{tpu_custom_call.1} parent=31 // pred_check_branch
          %205 = sbr.rel (%p203) target = $region36
        $region35: #{tpu_custom_call.1} parent=31 // pred_region
          %207 = dma.done %s199, 4096
        $region36: #{tpu_custom_call.1} parent=31 // pred_fallthru
          _
        // Predicated region
        $region37: #{tpu_custom_call.1} parent=31 // pred_check
          %p208 = pneg %p77
        $region38: #{tpu_custom_call.1} parent=31 // pred_check_branch
          %210 = sbr.rel (%p208) target = $region40
        $region39: #{tpu_custom_call.1} parent=31 // pred_region
          %212 = dma.done [#allocation10], 32768
        $region40: #{tpu_custom_call.1} parent=31 // pred_fallthru
          _
        // Predicated region
        $region41: #{tpu_custom_call.1} parent=31 // pred_check
          %p213 = pneg %p98
        $region42: #{tpu_custom_call.1} parent=31 // pred_check_branch
          %215 = sbr.rel (%p213) target = $region44
        $region43: #{tpu_custom_call.1} parent=31 // pred_region
          %217 = dma.done [#allocation10], 2048
        $region44: #{tpu_custom_call.1} parent=31 // pred_fallthru
          _
        %s218 = sand.u32 %s43, 1
        %s219 = scalar_lea.sflag [#allocation7], %s218
        %s220 = sand.u32 %s43, 1
        %s221 = smul.addr %s220, 256
        %s222 = scalar_lea.vmem [#allocation6], %s221
        %p223 = pneg %p56
        %p224 = pneg %p53
        %p225 = pneg %p77
        %p226 = pneg %p74
        %p227 = pneg %p98
        %p228 = pneg %p95
        %p229 = pneg %p119
        %p230 = pneg %p116
        %s231 = ssub.s32 1, %s23
        %s232 = smul.u32 %s24, %s231
        %s233 = smul.u32 4, %s232
        %p234 = scmp.eq.s32.totalorder %s23, 0
        // Predicated region
        $region45: #{tpu_custom_call.1} parent=31 // pred_check
          %p235 = pneg %p234
        $region46: #{tpu_custom_call.1} parent=31 // pred_check_branch
          %237 = sbr.rel (%p235) target = $region48
        $region47: #{tpu_custom_call.1} parent=31 // pred_region
          %p238 = scmp.eq.s32.totalorder %s24, 0
          // Predicated region
          $region49: #{tpu_custom_call.1} parent=47 // pred_check
            %p239 = pneg %p238
          $region50: #{tpu_custom_call.1} parent=47 // pred_check_branch
            %241 = sbr.rel (%p239) target = $region52
          $region51: #{tpu_custom_call.1} parent=47 // pred_region
            %v242 = vlaneseq
            %vm243 = vcmp.ge.s32.totalorder %v242, 0
            %vm244 = vcmp.lt.s32.totalorder %v242, 256
            %vm245 = vmand %vm243, %vm244
            %246 = vst.msk [vmem:[#allocation2] sm:$0x3] %vm245, 0.0
            %247 = vst.msk [vmem:[#allocation3] sm:$0x3] %vm245, 0.0
          $region52: #{tpu_custom_call.1} parent=47 // pred_fallthru
            _
          %v248 = vld [vmem:[%s202] sm:$0xff]
          %v249 = vld [vmem:[%s202 + $0x8] sm:$0xff]
          %v250 = vld [vmem:[%s202 + $0x10] sm:$0xff]
          %v251 = vld [vmem:[%s202 + $0x18] sm:$0xff]
          %v252 = vld [vmem:[%s202 + $0x20] sm:$0xff]
          %v253 = vld [vmem:[%s202 + $0x28] sm:$0xff]
          %v254 = vld [vmem:[%s202 + $0x30] sm:$0xff]
          %v255 = vld [vmem:[%s202 + $0x38] sm:$0xff]
          %v256 = vld [vmem:[%s202 + $0x40] sm:$0xff]
          %v257 = vld [vmem:[%s202 + $0x48] sm:$0xff]
          %v258 = vld [vmem:[%s202 + $0x50] sm:$0xff]
          %v259 = vld [vmem:[%s202 + $0x58] sm:$0xff]
          %v260 = vld [vmem:[%s202 + $0x60] sm:$0xff]
          %v261 = vld [vmem:[%s202 + $0x68] sm:$0xff]
          %v262 = vld [vmem:[%s202 + $0x70] sm:$0xff]
          %v263 = vld [vmem:[%s202 + $0x78] sm:$0xff]
          %v264 = vld [vmem:[%s202 + $0x80] sm:$0xff]
          %v265 = vld [vmem:[%s202 + $0x88] sm:$0xff]
          %v266 = vld [vmem:[%s202 + $0x90] sm:$0xff]
          %v267 = vld [vmem:[%s202 + $0x98] sm:$0xff]
          %v268 = vld [vmem:[%s202 + $0xa0] sm:$0xff]
          %v269 = vld [vmem:[%s202 + $0xa8] sm:$0xff]
          %v270 = vld [vmem:[%s202 + $0xb0] sm:$0xff]
          %v271 = vld [vmem:[%s202 + $0xb8] sm:$0xff]
          %v272 = vld [vmem:[%s202 + $0xc0] sm:$0xff]
          %v273 = vld [vmem:[%s202 + $0xc8] sm:$0xff]
          %v274 = vld [vmem:[%s202 + $0xd0] sm:$0xff]
          %v275 = vld [vmem:[%s202 + $0xd8] sm:$0xff]
          %v276 = vld [vmem:[%s202 + $0xe0] sm:$0xff]
          %v277 = vld [vmem:[%s202 + $0xe8] sm:$0xff]
          %v278 = vld [vmem:[%s202 + $0xf0] sm:$0xff]
          %v279 = vld [vmem:[%s202 + $0xf8] sm:$0xff]
          %v280 = vld [vmem:[#allocation9] sm:$0xff]
          %v281 = vld [vmem:[#allocation9 + $0x8] sm:$0xff]
          %v282 = vld [vmem:[#allocation9 + $0x10] sm:$0xff]
          %v283 = vld [vmem:[#allocation9 + $0x18] sm:$0xff]
          %v284 = vld [vmem:[#allocation9 + $0x20] sm:$0xff]
          %v285 = vld [vmem:[#allocation9 + $0x28] sm:$0xff]
          %v286 = vld [vmem:[#allocation9 + $0x30] sm:$0xff]
          %v287 = vld [vmem:[#allocation9 + $0x38] sm:$0xff]
          %v288 = vld [vmem:[#allocation9 + $0x40] sm:$0xff]
          %v289 = vld [vmem:[#allocation9 + $0x48] sm:$0xff]
          %v290 = vld [vmem:[#allocation9 + $0x50] sm:$0xff]
          %v291 = vld [vmem:[#allocation9 + $0x58] sm:$0xff]
          %v292 = vld [vmem:[#allocation9 + $0x60] sm:$0xff]
          %v293 = vld [vmem:[#allocation9 + $0x68] sm:$0xff]
          %v294 = vld [vmem:[#allocation9 + $0x70] sm:$0xff]
          %v295 = vld [vmem:[#allocation9 + $0x78] sm:$0xff]
          %v296 = vld [vmem:[#allocation9 + $0x80] sm:$0xff]
          %v297 = vld [vmem:[#allocation9 + $0x88] sm:$0xff]
          %v298 = vld [vmem:[#allocation9 + $0x90] sm:$0xff]
          %v299 = vld [vmem:[#allocation9 + $0x98] sm:$0xff]
          %v300 = vld [vmem:[#allocation9 + $0xa0] sm:$0xff]
          %v301 = vld [vmem:[#allocation9 + $0xa8] sm:$0xff]
          %v302 = vld [vmem:[#allocation9 + $0xb0] sm:$0xff]
          %v303 = vld [vmem:[#allocation9 + $0xb8] sm:$0xff]
          %v304 = vld [vmem:[#allocation9 + $0xc0] sm:$0xff]
          %v305 = vld [vmem:[#allocation9 + $0xc8] sm:$0xff]
          %v306 = vld [vmem:[#allocation9 + $0xd0] sm:$0xff]
          %v307 = vld [vmem:[#allocation9 + $0xd8] sm:$0xff]
          %v308 = vld [vmem:[#allocation9 + $0xe0] sm:$0xff]
          %v309 = vld [vmem:[#allocation9 + $0xe8] sm:$0xff]
          %v310 = vld [vmem:[#allocation9 + $0xf0] sm:$0xff]
          %v311 = vld [vmem:[#allocation9 + $0xf8] sm:$0xff]
          %v312 = vld [vmem:[#allocation9 + $0x100] sm:$0xff]
          %v313 = vld [vmem:[#allocation9 + $0x108] sm:$0xff]
          %v314 = vld [vmem:[#allocation9 + $0x110] sm:$0xff]
          %v315 = vld [vmem:[#allocation9 + $0x118] sm:$0xff]
          %v316 = vld [vmem:[#allocation9 + $0x120] sm:$0xff]
          %v317 = vld [vmem:[#allocation9 + $0x128] sm:$0xff]
          %v318 = vld [vmem:[#allocation9 + $0x130] sm:$0xff]
          %v319 = vld [vmem:[#allocation9 + $0x138] sm:$0xff]
          %v320 = vld [vmem:[#allocation9 + $0x140] sm:$0xff]
          %v321 = vld [vmem:[#allocation9 + $0x148] sm:$0xff]
          %v322 = vld [vmem:[#allocation9 + $0x150] sm:$0xff]
          %v323 = vld [vmem:[#allocation9 + $0x158] sm:$0xff]
          %v324 = vld [vmem:[#allocation9 + $0x160] sm:$0xff]
          %v325 = vld [vmem:[#allocation9 + $0x168] sm:$0xff]
          %v326 = vld [vmem:[#allocation9 + $0x170] sm:$0xff]
          %v327 = vld [vmem:[#allocation9 + $0x178] sm:$0xff]
          %v328 = vld [vmem:[#allocation9 + $0x180] sm:$0xff]
          %v329 = vld [vmem:[#allocation9 + $0x188] sm:$0xff]
          %v330 = vld [vmem:[#allocation9 + $0x190] sm:$0xff]
          %v331 = vld [vmem:[#allocation9 + $0x198] sm:$0xff]
          %v332 = vld [vmem:[#allocation9 + $0x1a0] sm:$0xff]
          %v333 = vld [vmem:[#allocation9 + $0x1a8] sm:$0xff]
          %v334 = vld [vmem:[#allocation9 + $0x1b0] sm:$0xff]
          %v335 = vld [vmem:[#allocation9 + $0x1b8] sm:$0xff]
          %v336 = vld [vmem:[#allocation9 + $0x1c0] sm:$0xff]
          %v337 = vld [vmem:[#allocation9 + $0x1c8] sm:$0xff]
          %v338 = vld [vmem:[#allocation9 + $0x1d0] sm:$0xff]
          %v339 = vld [vmem:[#allocation9 + $0x1d8] sm:$0xff]
          %v340 = vld [vmem:[#allocation9 + $0x1e0] sm:$0xff]
          %v341 = vld [vmem:[#allocation9 + $0x1e8] sm:$0xff]
          %v342 = vld [vmem:[#allocation9 + $0x1f0] sm:$0xff]
          %v343 = vld [vmem:[#allocation9 + $0x1f8] sm:$0xff]
          %v344 = vld [vmem:[#allocation9 + $0x200] sm:$0xff]
          %v345 = vld [vmem:[#allocation9 + $0x208] sm:$0xff]
          %v346 = vld [vmem:[#allocation9 + $0x210] sm:$0xff]
          %v347 = vld [vmem:[#allocation9 + $0x218] sm:$0xff]
          %v348 = vld [vmem:[#allocation9 + $0x220] sm:$0xff]
          %v349 = vld [vmem:[#allocation9 + $0x228] sm:$0xff]
          %v350 = vld [vmem:[#allocation9 + $0x230] sm:$0xff]
          %v351 = vld [vmem:[#allocation9 + $0x238] sm:$0xff]
          %v352 = vld [vmem:[#allocation9 + $0x240] sm:$0xff]
          %v353 = vld [vmem:[#allocation9 + $0x248] sm:$0xff]
          %v354 = vld [vmem:[#allocation9 + $0x250] sm:$0xff]
          %v355 = vld [vmem:[#allocation9 + $0x258] sm:$0xff]
          %v356 = vld [vmem:[#allocation9 + $0x260] sm:$0xff]
          %v357 = vld [vmem:[#allocation9 + $0x268] sm:$0xff]
          %v358 = vld [vmem:[#allocation9 + $0x270] sm:$0xff]
          %v359 = vld [vmem:[#allocation9 + $0x278] sm:$0xff]
          %v360 = vld [vmem:[#allocation9 + $0x280] sm:$0xff]
          %v361 = vld [vmem:[#allocation9 + $0x288] sm:$0xff]
          %v362 = vld [vmem:[#allocation9 + $0x290] sm:$0xff]
          %v363 = vld [vmem:[#allocation9 + $0x298] sm:$0xff]
          %v364 = vld [vmem:[#allocation9 + $0x2a0] sm:$0xff]
          %v365 = vld [vmem:[#allocation9 + $0x2a8] sm:$0xff]
          %v366 = vld [vmem:[#allocation9 + $0x2b0] sm:$0xff]
          %v367 = vld [vmem:[#allocation9 + $0x2b8] sm:$0xff]
          %v368 = vld [vmem:[#allocation9 + $0x2c0] sm:$0xff]
          %v369 = vld [vmem:[#allocation9 + $0x2c8] sm:$0xff]
          %v370 = vld [vmem:[#allocation9 + $0x2d0] sm:$0xff]
          %v371 = vld [vmem:[#allocation9 + $0x2d8] sm:$0xff]
          %v372 = vld [vmem:[#allocation9 + $0x2e0] sm:$0xff]
          %v373 = vld [vmem:[#allocation9 + $0x2e8] sm:$0xff]
          %v374 = vld [vmem:[#allocation9 + $0x2f0] sm:$0xff]
          %v375 = vld [vmem:[#allocation9 + $0x2f8] sm:$0xff]
          %v376 = vld [vmem:[#allocation9 + $0x300] sm:$0xff]
          %v377 = vld [vmem:[#allocation9 + $0x308] sm:$0xff]
          %v378 = vld [vmem:[#allocation9 + $0x310] sm:$0xff]
          %v379 = vld [vmem:[#allocation9 + $0x318] sm:$0xff]
          %v380 = vld [vmem:[#allocation9 + $0x320] sm:$0xff]
          %v381 = vld [vmem:[#allocation9 + $0x328] sm:$0xff]
          %v382 = vld [vmem:[#allocation9 + $0x330] sm:$0xff]
          %v383 = vld [vmem:[#allocation9 + $0x338] sm:$0xff]
          %v384 = vld [vmem:[#allocation9 + $0x340] sm:$0xff]
          %v385 = vld [vmem:[#allocation9 + $0x348] sm:$0xff]
          %v386 = vld [vmem:[#allocation9 + $0x350] sm:$0xff]
          %v387 = vld [vmem:[#allocation9 + $0x358] sm:$0xff]
          %v388 = vld [vmem:[#allocation9 + $0x360] sm:$0xff]
          %v389 = vld [vmem:[#allocation9 + $0x368] sm:$0xff]
          %v390 = vld [vmem:[#allocation9 + $0x370] sm:$0xff]
          %v391 = vld [vmem:[#allocation9 + $0x378] sm:$0xff]
          %v392 = vld [vmem:[#allocation9 + $0x380] sm:$0xff]
          %v393 = vld [vmem:[#allocation9 + $0x388] sm:$0xff]
          %v394 = vld [vmem:[#allocation9 + $0x390] sm:$0xff]
          %v395 = vld [vmem:[#allocation9 + $0x398] sm:$0xff]
          %v396 = vld [vmem:[#allocation9 + $0x3a0] sm:$0xff]
          %v397 = vld [vmem:[#allocation9 + $0x3a8] sm:$0xff]
          %v398 = vld [vmem:[#allocation9 + $0x3b0] sm:$0xff]
          %v399 = vld [vmem:[#allocation9 + $0x3b8] sm:$0xff]
          %v400 = vld [vmem:[#allocation9 + $0x3c0] sm:$0xff]
          %v401 = vld [vmem:[#allocation9 + $0x3c8] sm:$0xff]
          %v402 = vld [vmem:[#allocation9 + $0x3d0] sm:$0xff]
          %v403 = vld [vmem:[#allocation9 + $0x3d8] sm:$0xff]
          %v404 = vld [vmem:[#allocation9 + $0x3e0] sm:$0xff]
          %v405 = vld [vmem:[#allocation9 + $0x3e8] sm:$0xff]
          %v406 = vld [vmem:[#allocation9 + $0x3f0] sm:$0xff]
          %v407 = vld [vmem:[#allocation9 + $0x3f8] sm:$0xff]
          %v408 = vld [vmem:[#allocation9 + $0x400] sm:$0xff]
          %v409 = vld [vmem:[#allocation9 + $0x408] sm:$0xff]
          %v410 = vld [vmem:[#allocation9 + $0x410] sm:$0xff]
          %v411 = vld [vmem:[#allocation9 + $0x418] sm:$0xff]
          %v412 = vld [vmem:[#allocation9 + $0x420] sm:$0xff]
          %v413 = vld [vmem:[#allocation9 + $0x428] sm:$0xff]
          %v414 = vld [vmem:[#allocation9 + $0x430] sm:$0xff]
          %v415 = vld [vmem:[#allocation9 + $0x438] sm:$0xff]
          %v416 = vld [vmem:[#allocation9 + $0x440] sm:$0xff]
          %v417 = vld [vmem:[#allocation9 + $0x448] sm:$0xff]
          %v418 = vld [vmem:[#allocation9 + $0x450] sm:$0xff]
          %v419 = vld [vmem:[#allocation9 + $0x458] sm:$0xff]
          %v420 = vld [vmem:[#allocation9 + $0x460] sm:$0xff]
          %v421 = vld [vmem:[#allocation9 + $0x468] sm:$0xff]
          %v422 = vld [vmem:[#allocation9 + $0x470] sm:$0xff]
          %v423 = vld [vmem:[#allocation9 + $0x478] sm:$0xff]
          %v424 = vld [vmem:[#allocation9 + $0x480] sm:$0xff]
          %v425 = vld [vmem:[#allocation9 + $0x488] sm:$0xff]
          %v426 = vld [vmem:[#allocation9 + $0x490] sm:$0xff]
          %v427 = vld [vmem:[#allocation9 + $0x498] sm:$0xff]
          %v428 = vld [vmem:[#allocation9 + $0x4a0] sm:$0xff]
          %v429 = vld [vmem:[#allocation9 + $0x4a8] sm:$0xff]
          %v430 = vld [vmem:[#allocation9 + $0x4b0] sm:$0xff]
          %v431 = vld [vmem:[#allocation9 + $0x4b8] sm:$0xff]
          %v432 = vld [vmem:[#allocation9 + $0x4c0] sm:$0xff]
          %v433 = vld [vmem:[#allocation9 + $0x4c8] sm:$0xff]
          %v434 = vld [vmem:[#allocation9 + $0x4d0] sm:$0xff]
          %v435 = vld [vmem:[#allocation9 + $0x4d8] sm:$0xff]
          %v436 = vld [vmem:[#allocation9 + $0x4e0] sm:$0xff]
          %v437 = vld [vmem:[#allocation9 + $0x4e8] sm:$0xff]
          %v438 = vld [vmem:[#allocation9 + $0x4f0] sm:$0xff]
          %v439 = vld [vmem:[#allocation9 + $0x4f8] sm:$0xff]
          %v440 = vld [vmem:[#allocation9 + $0x500] sm:$0xff]
          %v441 = vld [vmem:[#allocation9 + $0x508] sm:$0xff]
          %v442 = vld [vmem:[#allocation9 + $0x510] sm:$0xff]
          %v443 = vld [vmem:[#allocation9 + $0x518] sm:$0xff]
          %v444 = vld [vmem:[#allocation9 + $0x520] sm:$0xff]
          %v445 = vld [vmem:[#allocation9 + $0x528] sm:$0xff]
          %v446 = vld [vmem:[#allocation9 + $0x530] sm:$0xff]
          %v447 = vld [vmem:[#allocation9 + $0x538] sm:$0xff]
          %v448 = vld [vmem:[#allocation9 + $0x540] sm:$0xff]
          %v449 = vld [vmem:[#allocation9 + $0x548] sm:$0xff]
          %v450 = vld [vmem:[#allocation9 + $0x550] sm:$0xff]
          %v451 = vld [vmem:[#allocation9 + $0x558] sm:$0xff]
          %v452 = vld [vmem:[#allocation9 + $0x560] sm:$0xff]
          %v453 = vld [vmem:[#allocation9 + $0x568] sm:$0xff]
          %v454 = vld [vmem:[#allocation9 + $0x570] sm:$0xff]
          %v455 = vld [vmem:[#allocation9 + $0x578] sm:$0xff]
          %v456 = vld [vmem:[#allocation9 + $0x580] sm:$0xff]
          %v457 = vld [vmem:[#allocation9 + $0x588] sm:$0xff]
          %v458 = vld [vmem:[#allocation9 + $0x590] sm:$0xff]
          %v459 = vld [vmem:[#allocation9 + $0x598] sm:$0xff]
          %v460 = vld [vmem:[#allocation9 + $0x5a0] sm:$0xff]
          %v461 = vld [vmem:[#allocation9 + $0x5a8] sm:$0xff]
          %v462 = vld [vmem:[#allocation9 + $0x5b0] sm:$0xff]
          %v463 = vld [vmem:[#allocation9 + $0x5b8] sm:$0xff]
          %v464 = vld [vmem:[#allocation9 + $0x5c0] sm:$0xff]
          %v465 = vld [vmem:[#allocation9 + $0x5c8] sm:$0xff]
          %v466 = vld [vmem:[#allocation9 + $0x5d0] sm:$0xff]
          %v467 = vld [vmem:[#allocation9 + $0x5d8] sm:$0xff]
          %v468 = vld [vmem:[#allocation9 + $0x5e0] sm:$0xff]
          %v469 = vld [vmem:[#allocation9 + $0x5e8] sm:$0xff]
          %v470 = vld [vmem:[#allocation9 + $0x5f0] sm:$0xff]
          %v471 = vld [vmem:[#allocation9 + $0x5f8] sm:$0xff]
          %v472 = vld [vmem:[#allocation9 + $0x600] sm:$0xff]
          %v473 = vld [vmem:[#allocation9 + $0x608] sm:$0xff]
          %v474 = vld [vmem:[#allocation9 + $0x610] sm:$0xff]
          %v475 = vld [vmem:[#allocation9 + $0x618] sm:$0xff]
          %v476 = vld [vmem:[#allocation9 + $0x620] sm:$0xff]
          %v477 = vld [vmem:[#allocation9 + $0x628] sm:$0xff]
          %v478 = vld [vmem:[#allocation9 + $0x630] sm:$0xff]
          %v479 = vld [vmem:[#allocation9 + $0x638] sm:$0xff]
          %v480 = vld [vmem:[#allocation9 + $0x640] sm:$0xff]
          %v481 = vld [vmem:[#allocation9 + $0x648] sm:$0xff]
          %v482 = vld [vmem:[#allocation9 + $0x650] sm:$0xff]
          %v483 = vld [vmem:[#allocation9 + $0x658] sm:$0xff]
          %v484 = vld [vmem:[#allocation9 + $0x660] sm:$0xff]
          %v485 = vld [vmem:[#allocation9 + $0x668] sm:$0xff]
          %v486 = vld [vmem:[#allocation9 + $0x670] sm:$0xff]
          %v487 = vld [vmem:[#allocation9 + $0x678] sm:$0xff]
          %v488 = vld [vmem:[#allocation9 + $0x680] sm:$0xff]
          %v489 = vld [vmem:[#allocation9 + $0x688] sm:$0xff]
          %v490 = vld [vmem:[#allocation9 + $0x690] sm:$0xff]
          %v491 = vld [vmem:[#allocation9 + $0x698] sm:$0xff]
          %v492 = vld [vmem:[#allocation9 + $0x6a0] sm:$0xff]
          %v493 = vld [vmem:[#allocation9 + $0x6a8] sm:$0xff]
          %v494 = vld [vmem:[#allocation9 + $0x6b0] sm:$0xff]
          %v495 = vld [vmem:[#allocation9 + $0x6b8] sm:$0xff]
          %v496 = vld [vmem:[#allocation9 + $0x6c0] sm:$0xff]
          %v497 = vld [vmem:[#allocation9 + $0x6c8] sm:$0xff]
          %v498 = vld [vmem:[#allocation9 + $0x6d0] sm:$0xff]
          %v499 = vld [vmem:[#allocation9 + $0x6d8] sm:$0xff]
          %v500 = vld [vmem:[#allocation9 + $0x6e0] sm:$0xff]
          %v501 = vld [vmem:[#allocation9 + $0x6e8] sm:$0xff]
          %v502 = vld [vmem:[#allocation9 + $0x6f0] sm:$0xff]
          %v503 = vld [vmem:[#allocation9 + $0x6f8] sm:$0xff]
          %v504 = vld [vmem:[#allocation9 + $0x700] sm:$0xff]
          %v505 = vld [vmem:[#allocation9 + $0x708] sm:$0xff]
          %v506 = vld [vmem:[#allocation9 + $0x710] sm:$0xff]
          %v507 = vld [vmem:[#allocation9 + $0x718] sm:$0xff]
          %v508 = vld [vmem:[#allocation9 + $0x720] sm:$0xff]
          %v509 = vld [vmem:[#allocation9 + $0x728] sm:$0xff]
          %v510 = vld [vmem:[#allocation9 + $0x730] sm:$0xff]
          %v511 = vld [vmem:[#allocation9 + $0x738] sm:$0xff]
          %v512 = vld [vmem:[#allocation9 + $0x740] sm:$0xff]
          %v513 = vld [vmem:[#allocation9 + $0x748] sm:$0xff]
          %v514 = vld [vmem:[#allocation9 + $0x750] sm:$0xff]
          %v515 = vld [vmem:[#allocation9 + $0x758] sm:$0xff]
          %v516 = vld [vmem:[#allocation9 + $0x760] sm:$0xff]
          %v517 = vld [vmem:[#allocation9 + $0x768] sm:$0xff]
          %v518 = vld [vmem:[#allocation9 + $0x770] sm:$0xff]
          %v519 = vld [vmem:[#allocation9 + $0x778] sm:$0xff]
          %v520 = vld [vmem:[#allocation9 + $0x780] sm:$0xff]
          %v521 = vld [vmem:[#allocation9 + $0x788] sm:$0xff]
          %v522 = vld [vmem:[#allocation9 + $0x790] sm:$0xff]
          %v523 = vld [vmem:[#allocation9 + $0x798] sm:$0xff]
          %v524 = vld [vmem:[#allocation9 + $0x7a0] sm:$0xff]
          %v525 = vld [vmem:[#allocation9 + $0x7a8] sm:$0xff]
          %v526 = vld [vmem:[#allocation9 + $0x7b0] sm:$0xff]
          %v527 = vld [vmem:[#allocation9 + $0x7b8] sm:$0xff]
          %v528 = vld [vmem:[#allocation9 + $0x7c0] sm:$0xff]
          %v529 = vld [vmem:[#allocation9 + $0x7c8] sm:$0xff]
          %v530 = vld [vmem:[#allocation9 + $0x7d0] sm:$0xff]
          %v531 = vld [vmem:[#allocation9 + $0x7d8] sm:$0xff]
          %v532 = vld [vmem:[#allocation9 + $0x7e0] sm:$0xff]
          %v533 = vld [vmem:[#allocation9 + $0x7e8] sm:$0xff]
          %v534 = vld [vmem:[#allocation9 + $0x7f0] sm:$0xff]
          %v535 = vld [vmem:[#allocation9 + $0x7f8] sm:$0xff]
          %v568 = vunpack.c.l.b16 %v248
          %v569 = vunpack.c.h.b16 %v248
          %v570 = vunpack.c.l.b16 %v249
          %v571 = vunpack.c.h.b16 %v249
          %v572 = vunpack.c.l.b16 %v250
          %v573 = vunpack.c.h.b16 %v250
          %v574 = vunpack.c.l.b16 %v251
          %v575 = vunpack.c.h.b16 %v251
          %v576 = vunpack.c.l.b16 %v252
          %v577 = vunpack.c.h.b16 %v252
          %v578 = vunpack.c.l.b16 %v253
          %v579 = vunpack.c.h.b16 %v253
          %v580 = vunpack.c.l.b16 %v254
          %v581 = vunpack.c.h.b16 %v254
          %v582 = vunpack.c.l.b16 %v255
          %v583 = vunpack.c.h.b16 %v255
          %v584 = vunpack.c.l.b16 %v256
          %v585 = vunpack.c.h.b16 %v256
          %v586 = vunpack.c.l.b16 %v257
          %v587 = vunpack.c.h.b16 %v257
          %v588 = vunpack.c.l.b16 %v258
          %v589 = vunpack.c.h.b16 %v258
          %v590 = vunpack.c.l.b16 %v259
          %v591 = vunpack.c.h.b16 %v259
          %v592 = vunpack.c.l.b16 %v260
          %v593 = vunpack.c.h.b16 %v260
          %v594 = vunpack.c.l.b16 %v261
          %v595 = vunpack.c.h.b16 %v261
          %v596 = vunpack.c.l.b16 %v262
          %v597 = vunpack.c.h.b16 %v262
          %v598 = vunpack.c.l.b16 %v263
          %v599 = vunpack.c.h.b16 %v263
          %v600 = vunpack.c.l.b16 %v264
          %v601 = vunpack.c.h.b16 %v264
          %v602 = vunpack.c.l.b16 %v265
          %v603 = vunpack.c.h.b16 %v265
          %v604 = vunpack.c.l.b16 %v266
          %v605 = vunpack.c.h.b16 %v266
          %v606 = vunpack.c.l.b16 %v267
          %v607 = vunpack.c.h.b16 %v267
          %v608 = vunpack.c.l.b16 %v268
          %v609 = vunpack.c.h.b16 %v268
          %v610 = vunpack.c.l.b16 %v269
          %v611 = vunpack.c.h.b16 %v269
          %v612 = vunpack.c.l.b16 %v270
          %v613 = vunpack.c.h.b16 %v270
          %v614 = vunpack.c.l.b16 %v271
          %v615 = vunpack.c.h.b16 %v271
          %v616 = vunpack.c.l.b16 %v272
          %v617 = vunpack.c.h.b16 %v272
          %v618 = vunpack.c.l.b16 %v273
          %v619 = vunpack.c.h.b16 %v273
          %v620 = vunpack.c.l.b16 %v274
          %v621 = vunpack.c.h.b16 %v274
          %v622 = vunpack.c.l.b16 %v275
          %v623 = vunpack.c.h.b16 %v275
          %v624 = vunpack.c.l.b16 %v276
          %v625 = vunpack.c.h.b16 %v276
          %v626 = vunpack.c.l.b16 %v277
          %v627 = vunpack.c.h.b16 %v277
          %v628 = vunpack.c.l.b16 %v278
          %v629 = vunpack.c.h.b16 %v278
          %v630 = vunpack.c.l.b16 %v279
          %v631 = vunpack.c.h.b16 %v279
          %v632 = vpack.c.b16 %v584, %v568
          %v633 = vpack.c.b16 %v585, %v569
          %v634 = vpack.c.b16 %v586, %v570
          %v635 = vpack.c.b16 %v587, %v571
          %v636 = vpack.c.b16 %v588, %v572
          %v637 = vpack.c.b16 %v589, %v573
          %v638 = vpack.c.b16 %v590, %v574
          %v639 = vpack.c.b16 %v591, %v575
          %v640 = vpack.c.b16 %v592, %v576
          %v641 = vpack.c.b16 %v593, %v577
          %v642 = vpack.c.b16 %v594, %v578
          %v643 = vpack.c.b16 %v595, %v579
          %v644 = vpack.c.b16 %v596, %v580
          %v645 = vpack.c.b16 %v597, %v581
          %v646 = vpack.c.b16 %v598, %v582
          %v647 = vpack.c.b16 %v599, %v583
          %v648 = vpack.c.b16 %v616, %v600
          %v649 = vpack.c.b16 %v617, %v601
          %v650 = vpack.c.b16 %v618, %v602
          %v651 = vpack.c.b16 %v619, %v603
          %v652 = vpack.c.b16 %v620, %v604
          %v653 = vpack.c.b16 %v621, %v605
          %v654 = vpack.c.b16 %v622, %v606
          %v655 = vpack.c.b16 %v623, %v607
          %v656 = vpack.c.b16 %v624, %v608
          %v657 = vpack.c.b16 %v625, %v609
          %v658 = vpack.c.b16 %v626, %v610
          %v659 = vpack.c.b16 %v627, %v611
          %v660 = vpack.c.b16 %v628, %v612
          %v661 = vpack.c.b16 %v629, %v613
          %v662 = vpack.c.b16 %v630, %v614
          %v663 = vpack.c.b16 %v631, %v615
          %v952 = vunpack.c.l.b16 %v280
          %v953 = vunpack.c.h.b16 %v280
          %v954 = vunpack.c.l.b16 %v281
          %v955 = vunpack.c.h.b16 %v281
          %v956 = vunpack.c.l.b16 %v282
          %v957 = vunpack.c.h.b16 %v282
          %v958 = vunpack.c.l.b16 %v283
          %v959 = vunpack.c.h.b16 %v283
          %v960 = vunpack.c.l.b16 %v284
          %v961 = vunpack.c.h.b16 %v284
          %v962 = vunpack.c.l.b16 %v285
          %v963 = vunpack.c.h.b16 %v285
          %v964 = vunpack.c.l.b16 %v286
          %v965 = vunpack.c.h.b16 %v286
          %v966 = vunpack.c.l.b16 %v287
          %v967 = vunpack.c.h.b16 %v287
          %v968 = vunpack.c.l.b16 %v288
          %v969 = vunpack.c.h.b16 %v288
          %v970 = vunpack.c.l.b16 %v289
          %v971 = vunpack.c.h.b16 %v289
          %v972 = vunpack.c.l.b16 %v290
          %v973 = vunpack.c.h.b16 %v290
          %v974 = vunpack.c.l.b16 %v291
          %v975 = vunpack.c.h.b16 %v291
          %v976 = vunpack.c.l.b16 %v292
          %v977 = vunpack.c.h.b16 %v292
          %v978 = vunpack.c.l.b16 %v293
          %v979 = vunpack.c.h.b16 %v293
          %v980 = vunpack.c.l.b16 %v294
          %v981 = vunpack.c.h.b16 %v294
          %v982 = vunpack.c.l.b16 %v295
          %v983 = vunpack.c.h.b16 %v295
          %v984 = vunpack.c.l.b16 %v296
          %v985 = vunpack.c.h.b16 %v296
          %v986 = vunpack.c.l.b16 %v297
          %v987 = vunpack.c.h.b16 %v297
          %v988 = vunpack.c.l.b16 %v298
          %v989 = vunpack.c.h.b16 %v298
          %v990 = vunpack.c.l.b16 %v299
          %v991 = vunpack.c.h.b16 %v299
          %v992 = vunpack.c.l.b16 %v300
          %v993 = vunpack.c.h.b16 %v300
          %v994 = vunpack.c.l.b16 %v301
          %v995 = vunpack.c.h.b16 %v301
          %v996 = vunpack.c.l.b16 %v302
          %v997 = vunpack.c.h.b16 %v302
          %v998 = vunpack.c.l.b16 %v303
          %v999 = vunpack.c.h.b16 %v303
          %v1000 = vunpack.c.l.b16 %v304
          %v1001 = vunpack.c.h.b16 %v304
          %v1002 = vunpack.c.l.b16 %v305
          %v1003 = vunpack.c.h.b16 %v305
          %v1004 = vunpack.c.l.b16 %v306
          %v1005 = vunpack.c.h.b16 %v306
          %v1006 = vunpack.c.l.b16 %v307
          %v1007 = vunpack.c.h.b16 %v307
          %v1008 = vunpack.c.l.b16 %v308
          %v1009 = vunpack.c.h.b16 %v308
          %v1010 = vunpack.c.l.b16 %v309
          %v1011 = vunpack.c.h.b16 %v309
          %v1012 = vunpack.c.l.b16 %v310
          %v1013 = vunpack.c.h.b16 %v310
          %v1014 = vunpack.c.l.b16 %v311
          %v1015 = vunpack.c.h.b16 %v311
          %v1016 = vunpack.c.l.b16 %v312
          %v1017 = vunpack.c.h.b16 %v312
          %v1018 = vunpack.c.l.b16 %v313
          %v1019 = vunpack.c.h.b16 %v313
          %v1020 = vunpack.c.l.b16 %v314
          %v1021 = vunpack.c.h.b16 %v314
          %v1022 = vunpack.c.l.b16 %v315
          %v1023 = vunpack.c.h.b16 %v315
          %v1024 = vunpack.c.l.b16 %v316
          %v1025 = vunpack.c.h.b16 %v316
          %v1026 = vunpack.c.l.b16 %v317
          %v1027 = vunpack.c.h.b16 %v317
          %v1028 = vunpack.c.l.b16 %v318
          %v1029 = vunpack.c.h.b16 %v318
          %v1030 = vunpack.c.l.b16 %v319
          %v1031 = vunpack.c.h.b16 %v319
          %v1032 = vunpack.c.l.b16 %v320
          %v1033 = vunpack.c.h.b16 %v320
          %v1034 = vunpack.c.l.b16 %v321
          %v1035 = vunpack.c.h.b16 %v321
          %v1036 = vunpack.c.l.b16 %v322
          %v1037 = vunpack.c.h.b16 %v322
          %v1038 = vunpack.c.l.b16 %v323
          %v1039 = vunpack.c.h.b16 %v323
          %v1040 = vunpack.c.l.b16 %v324
          %v1041 = vunpack.c.h.b16 %v324
          %v1042 = vunpack.c.l.b16 %v325
          %v1043 = vunpack.c.h.b16 %v325
          %v1044 = vunpack.c.l.b16 %v326
          %v1045 = vunpack.c.h.b16 %v326
          %v1046 = vunpack.c.l.b16 %v327
          %v1047 = vunpack.c.h.b16 %v327
          %v1048 = vunpack.c.l.b16 %v328
          %v1049 = vunpack.c.h.b16 %v328
          %v1050 = vunpack.c.l.b16 %v329
          %v1051 = vunpack.c.h.b16 %v329
          %v1052 = vunpack.c.l.b16 %v330
          %v1053 = vunpack.c.h.b16 %v330
          %v1054 = vunpack.c.l.b16 %v331
          %v1055 = vunpack.c.h.b16 %v331
          %v1056 = vunpack.c.l.b16 %v332
          %v1057 = vunpack.c.h.b16 %v332
          %v1058 = vunpack.c.l.b16 %v333
          %v1059 = vunpack.c.h.b16 %v333
          %v1060 = vunpack.c.l.b16 %v334
          %v1061 = vunpack.c.h.b16 %v334
          %v1062 = vunpack.c.l.b16 %v335
          %v1063 = vunpack.c.h.b16 %v335
          %v1064 = vunpack.c.l.b16 %v336
          %v1065 = vunpack.c.h.b16 %v336
          %v1066 = vunpack.c.l.b16 %v337
          %v1067 = vunpack.c.h.b16 %v337
          %v1068 = vunpack.c.l.b16 %v338
          %v1069 = vunpack.c.h.b16 %v338
          %v1070 = vunpack.c.l.b16 %v339
          %v1071 = vunpack.c.h.b16 %v339
          %v1072 = vunpack.c.l.b16 %v340
          %v1073 = vunpack.c.h.b16 %v340
          %v1074 = vunpack.c.l.b16 %v341
          %v1075 = vunpack.c.h.b16 %v341
          %v1076 = vunpack.c.l.b16 %v342
          %v1077 = vunpack.c.h.b16 %v342
          %v1078 = vunpack.c.l.b16 %v343
          %v1079 = vunpack.c.h.b16 %v343
          %v1080 = vunpack.c.l.b16 %v344
          %v1081 = vunpack.c.h.b16 %v344
          %v1082 = vunpack.c.l.b16 %v345
          %v1083 = vunpack.c.h.b16 %v345
          %v1084 = vunpack.c.l.b16 %v346
          %v1085 = vunpack.c.h.b16 %v346
          %v1086 = vunpack.c.l.b16 %v347
          %v1087 = vunpack.c.h.b16 %v347
          %v1088 = vunpack.c.l.b16 %v348
          %v1089 = vunpack.c.h.b16 %v348
          %v1090 = vunpack.c.l.b16 %v349
          %v1091 = vunpack.c.h.b16 %v349
          %v1092 = vunpack.c.l.b16 %v350
          %v1093 = vunpack.c.h.b16 %v350
          %v1094 = vunpack.c.l.b16 %v351
          %v1095 = vunpack.c.h.b16 %v351
          %v1096 = vunpack.c.l.b16 %v352
          %v1097 = vunpack.c.h.b16 %v352
          %v1098 = vunpack.c.l.b16 %v353
          %v1099 = vunpack.c.h.b16 %v353
          %v1100 = vunpack.c.l.b16 %v354
          %v1101 = vunpack.c.h.b16 %v354
          %v1102 = vunpack.c.l.b16 %v355
          %v1103 = vunpack.c.h.b16 %v355
          %v1104 = vunpack.c.l.b16 %v356
          %v1105 = vunpack.c.h.b16 %v356
          %v1106 = vunpack.c.l.b16 %v357
          %v1107 = vunpack.c.h.b16 %v357
          %v1108 = vunpack.c.l.b16 %v358
          %v1109 = vunpack.c.h.b16 %v358
          %v1110 = vunpack.c.l.b16 %v359
          %v1111 = vunpack.c.h.b16 %v359
          %v1112 = vunpack.c.l.b16 %v360
          %v1113 = vunpack.c.h.b16 %v360
          %v1114 = vunpack.c.l.b16 %v361
          %v1115 = vunpack.c.h.b16 %v361
          %v1116 = vunpack.c.l.b16 %v362
          %v1117 = vunpack.c.h.b16 %v362
          %v1118 = vunpack.c.l.b16 %v363
          %v1119 = vunpack.c.h.b16 %v363
          %v1120 = vunpack.c.l.b16 %v364
          %v1121 = vunpack.c.h.b16 %v364
          %v1122 = vunpack.c.l.b16 %v365
          %v1123 = vunpack.c.h.b16 %v365
          %v1124 = vunpack.c.l.b16 %v366
          %v1125 = vunpack.c.h.b16 %v366
          %v1126 = vunpack.c.l.b16 %v367
          %v1127 = vunpack.c.h.b16 %v367
          %v1128 = vunpack.c.l.b16 %v368
          %v1129 = vunpack.c.h.b16 %v368
          %v1130 = vunpack.c.l.b16 %v369
          %v1131 = vunpack.c.h.b16 %v369
          %v1132 = vunpack.c.l.b16 %v370
          %v1133 = vunpack.c.h.b16 %v370
          %v1134 = vunpack.c.l.b16 %v371
          %v1135 = vunpack.c.h.b16 %v371
          %v1136 = vunpack.c.l.b16 %v372
          %v1137 = vunpack.c.h.b16 %v372
          %v1138 = vunpack.c.l.b16 %v373
          %v1139 = vunpack.c.h.b16 %v373
          %v1140 = vunpack.c.l.b16 %v374
          %v1141 = vunpack.c.h.b16 %v374
          %v1142 = vunpack.c.l.b16 %v375
          %v1143 = vunpack.c.h.b16 %v375
          %v1144 = vunpack.c.l.b16 %v376
          %v1145 = vunpack.c.h.b16 %v376
          %v1146 = vunpack.c.l.b16 %v377
          %v1147 = vunpack.c.h.b16 %v377
          %v1148 = vunpack.c.l.b16 %v378
          %v1149 = vunpack.c.h.b16 %v378
          %v1150 = vunpack.c.l.b16 %v379
          %v1151 = vunpack.c.h.b16 %v379
          %v1152 = vunpack.c.l.b16 %v380
          %v1153 = vunpack.c.h.b16 %v380
          %v1154 = vunpack.c.l.b16 %v381
          %v1155 = vunpack.c.h.b16 %v381
          %v1156 = vunpack.c.l.b16 %v382
          %v1157 = vunpack.c.h.b16 %v382
          %v1158 = vunpack.c.l.b16 %v383
          %v1159 = vunpack.c.h.b16 %v383
          %v1160 = vunpack.c.l.b16 %v384
          %v1161 = vunpack.c.h.b16 %v384
          %v1162 = vunpack.c.l.b16 %v385
          %v1163 = vunpack.c.h.b16 %v385
          %v1164 = vunpack.c.l.b16 %v386
          %v1165 = vunpack.c.h.b16 %v386
          %v1166 = vunpack.c.l.b16 %v387
          %v1167 = vunpack.c.h.b16 %v387
          %v1168 = vunpack.c.l.b16 %v388
          %v1169 = vunpack.c.h.b16 %v388
          %v1170 = vunpack.c.l.b16 %v389
          %v1171 = vunpack.c.h.b16 %v389
          %v1172 = vunpack.c.l.b16 %v390
          %v1173 = vunpack.c.h.b16 %v390
          %v1174 = vunpack.c.l.b16 %v391
          %v1175 = vunpack.c.h.b16 %v391
          %v1176 = vunpack.c.l.b16 %v392
          %v1177 = vunpack.c.h.b16 %v392
          %v1178 = vunpack.c.l.b16 %v393
          %v1179 = vunpack.c.h.b16 %v393
          %v1180 = vunpack.c.l.b16 %v394
          %v1181 = vunpack.c.h.b16 %v394
          %v1182 = vunpack.c.l.b16 %v395
          %v1183 = vunpack.c.h.b16 %v395
          %v1184 = vunpack.c.l.b16 %v396
          %v1185 = vunpack.c.h.b16 %v396
          %v1186 = vunpack.c.l.b16 %v397
          %v1187 = vunpack.c.h.b16 %v397
          %v1188 = vunpack.c.l.b16 %v398
          %v1189 = vunpack.c.h.b16 %v398
          %v1190 = vunpack.c.l.b16 %v399
          %v1191 = vunpack.c.h.b16 %v399
          %v1192 = vunpack.c.l.b16 %v400
          %v1193 = vunpack.c.h.b16 %v400
          %v1194 = vunpack.c.l.b16 %v401
          %v1195 = vunpack.c.h.b16 %v401
          %v1196 = vunpack.c.l.b16 %v402
          %v1197 = vunpack.c.h.b16 %v402
          %v1198 = vunpack.c.l.b16 %v403
          %v1199 = vunpack.c.h.b16 %v403
          %v1200 = vunpack.c.l.b16 %v404
          %v1201 = vunpack.c.h.b16 %v404
          %v1202 = vunpack.c.l.b16 %v405
          %v1203 = vunpack.c.h.b16 %v405
          %v1204 = vunpack.c.l.b16 %v406
          %v1205 = vunpack.c.h.b16 %v406
          %v1206 = vunpack.c.l.b16 %v407
          %v1207 = vunpack.c.h.b16 %v407
          %v1208 = vunpack.c.l.b16 %v408
          %v1209 = vunpack.c.h.b16 %v408
          %v1210 = vunpack.c.l.b16 %v409
          %v1211 = vunpack.c.h.b16 %v409
          %v1212 = vunpack.c.l.b16 %v410
          %v1213 = vunpack.c.h.b16 %v410
          %v1214 = vunpack.c.l.b16 %v411
          %v1215 = vunpack.c.h.b16 %v411
          %v1216 = vunpack.c.l.b16 %v412
          %v1217 = vunpack.c.h.b16 %v412
          %v1218 = vunpack.c.l.b16 %v413
          %v1219 = vunpack.c.h.b16 %v413
          %v1220 = vunpack.c.l.b16 %v414
          %v1221 = vunpack.c.h.b16 %v414
          %v1222 = vunpack.c.l.b16 %v415
          %v1223 = vunpack.c.h.b16 %v415
          %v1224 = vunpack.c.l.b16 %v416
          %v1225 = vunpack.c.h.b16 %v416
          %v1226 = vunpack.c.l.b16 %v417
          %v1227 = vunpack.c.h.b16 %v417
          %v1228 = vunpack.c.l.b16 %v418
          %v1229 = vunpack.c.h.b16 %v418
          %v1230 = vunpack.c.l.b16 %v419
          %v1231 = vunpack.c.h.b16 %v419
          %v1232 = vunpack.c.l.b16 %v420
          %v1233 = vunpack.c.h.b16 %v420
          %v1234 = vunpack.c.l.b16 %v421
          %v1235 = vunpack.c.h.b16 %v421
          %v1236 = vunpack.c.l.b16 %v422
          %v1237 = vunpack.c.h.b16 %v422
          %v1238 = vunpack.c.l.b16 %v423
          %v1239 = vunpack.c.h.b16 %v423
          %v1240 = vunpack.c.l.b16 %v424
          %v1241 = vunpack.c.h.b16 %v424
          %v1242 = vunpack.c.l.b16 %v425
          %v1243 = vunpack.c.h.b16 %v425
          %v1244 = vunpack.c.l.b16 %v426
          %v1245 = vunpack.c.h.b16 %v426
          %v1246 = vunpack.c.l.b16 %v427
          %v1247 = vunpack.c.h.b16 %v427
          %v1248 = vunpack.c.l.b16 %v428
          %v1249 = vunpack.c.h.b16 %v428
          %v1250 = vunpack.c.l.b16 %v429
          %v1251 = vunpack.c.h.b16 %v429
          %v1252 = vunpack.c.l.b16 %v430
          %v1253 = vunpack.c.h.b16 %v430
          %v1254 = vunpack.c.l.b16 %v431
          %v1255 = vunpack.c.h.b16 %v431
          %v1256 = vunpack.c.l.b16 %v432
          %v1257 = vunpack.c.h.b16 %v432
          %v1258 = vunpack.c.l.b16 %v433
          %v1259 = vunpack.c.h.b16 %v433
          %v1260 = vunpack.c.l.b16 %v434
          %v1261 = vunpack.c.h.b16 %v434
          %v1262 = vunpack.c.l.b16 %v435
          %v1263 = vunpack.c.h.b16 %v435
          %v1264 = vunpack.c.l.b16 %v436
          %v1265 = vunpack.c.h.b16 %v436
          %v1266 = vunpack.c.l.b16 %v437
          %v1267 = vunpack.c.h.b16 %v437
          %v1268 = vunpack.c.l.b16 %v438
          %v1269 = vunpack.c.h.b16 %v438
          %v1270 = vunpack.c.l.b16 %v439
          %v1271 = vunpack.c.h.b16 %v439
          %v1272 = vunpack.c.l.b16 %v440
          %v1273 = vunpack.c.h.b16 %v440
          %v1274 = vunpack.c.l.b16 %v441
          %v1275 = vunpack.c.h.b16 %v441
          %v1276 = vunpack.c.l.b16 %v442
          %v1277 = vunpack.c.h.b16 %v442
          %v1278 = vunpack.c.l.b16 %v443
          %v1279 = vunpack.c.h.b16 %v443
          %v1280 = vunpack.c.l.b16 %v444
          %v1281 = vunpack.c.h.b16 %v444
          %v1282 = vunpack.c.l.b16 %v445
          %v1283 = vunpack.c.h.b16 %v445
          %v1284 = vunpack.c.l.b16 %v446
          %v1285 = vunpack.c.h.b16 %v446
          %v1286 = vunpack.c.l.b16 %v447
          %v1287 = vunpack.c.h.b16 %v447
          %v1288 = vunpack.c.l.b16 %v448
          %v1289 = vunpack.c.h.b16 %v448
          %v1290 = vunpack.c.l.b16 %v449
          %v1291 = vunpack.c.h.b16 %v449
          %v1292 = vunpack.c.l.b16 %v450
          %v1293 = vunpack.c.h.b16 %v450
          %v1294 = vunpack.c.l.b16 %v451
          %v1295 = vunpack.c.h.b16 %v451
          %v1296 = vunpack.c.l.b16 %v452
          %v1297 = vunpack.c.h.b16 %v452
          %v1298 = vunpack.c.l.b16 %v453
          %v1299 = vunpack.c.h.b16 %v453
          %v1300 = vunpack.c.l.b16 %v454
          %v1301 = vunpack.c.h.b16 %v454
          %v1302 = vunpack.c.l.b16 %v455
          %v1303 = vunpack.c.h.b16 %v455
          %v1304 = vunpack.c.l.b16 %v456
          %v1305 = vunpack.c.h.b16 %v456
          %v1306 = vunpack.c.l.b16 %v457
          %v1307 = vunpack.c.h.b16 %v457
          %v1308 = vunpack.c.l.b16 %v458
          %v1309 = vunpack.c.h.b16 %v458
          %v1310 = vunpack.c.l.b16 %v459
          %v1311 = vunpack.c.h.b16 %v459
          %v1312 = vunpack.c.l.b16 %v460
          %v1313 = vunpack.c.h.b16 %v460
          %v1314 = vunpack.c.l.b16 %v461
          %v1315 = vunpack.c.h.b16 %v461
          %v1316 = vunpack.c.l.b16 %v462
          %v1317 = vunpack.c.h.b16 %v462
          %v1318 = vunpack.c.l.b16 %v463
          %v1319 = vunpack.c.h.b16 %v463
          %v1320 = vunpack.c.l.b16 %v464
          %v1321 = vunpack.c.h.b16 %v464
          %v1322 = vunpack.c.l.b16 %v465
          %v1323 = vunpack.c.h.b16 %v465
          %v1324 = vunpack.c.l.b16 %v466
          %v1325 = vunpack.c.h.b16 %v466
          %v1326 = vunpack.c.l.b16 %v467
          %v1327 = vunpack.c.h.b16 %v467
          %v1328 = vunpack.c.l.b16 %v468
          %v1329 = vunpack.c.h.b16 %v468
          %v1330 = vunpack.c.l.b16 %v469
          %v1331 = vunpack.c.h.b16 %v469
          %v1332 = vunpack.c.l.b16 %v470
          %v1333 = vunpack.c.h.b16 %v470
          %v1334 = vunpack.c.l.b16 %v471
          %v1335 = vunpack.c.h.b16 %v471
          %v1336 = vunpack.c.l.b16 %v472
          %v1337 = vunpack.c.h.b16 %v472
          %v1338 = vunpack.c.l.b16 %v473
          %v1339 = vunpack.c.h.b16 %v473
          %v1340 = vunpack.c.l.b16 %v474
          %v1341 = vunpack.c.h.b16 %v474
          %v1342 = vunpack.c.l.b16 %v475
          %v1343 = vunpack.c.h.b16 %v475
          %v1344 = vunpack.c.l.b16 %v476
          %v1345 = vunpack.c.h.b16 %v476
          %v1346 = vunpack.c.l.b16 %v477
          %v1347 = vunpack.c.h.b16 %v477
          %v1348 = vunpack.c.l.b16 %v478
          %v1349 = vunpack.c.h.b16 %v478
          %v1350 = vunpack.c.l.b16 %v479
          %v1351 = vunpack.c.h.b16 %v479
          %v1352 = vunpack.c.l.b16 %v480
          %v1353 = vunpack.c.h.b16 %v480
          %v1354 = vunpack.c.l.b16 %v481
          %v1355 = vunpack.c.h.b16 %v481
          %v1356 = vunpack.c.l.b16 %v482
          %v1357 = vunpack.c.h.b16 %v482
          %v1358 = vunpack.c.l.b16 %v483
          %v1359 = vunpack.c.h.b16 %v483
          %v1360 = vunpack.c.l.b16 %v484
          %v1361 = vunpack.c.h.b16 %v484
          %v1362 = vunpack.c.l.b16 %v485
          %v1363 = vunpack.c.h.b16 %v485
          %v1364 = vunpack.c.l.b16 %v486
          %v1365 = vunpack.c.h.b16 %v486
          %v1366 = vunpack.c.l.b16 %v487
          %v1367 = vunpack.c.h.b16 %v487
          %v1368 = vunpack.c.l.b16 %v488
          %v1369 = vunpack.c.h.b16 %v488
          %v1370 = vunpack.c.l.b16 %v489
          %v1371 = vunpack.c.h.b16 %v489
          %v1372 = vunpack.c.l.b16 %v490
          %v1373 = vunpack.c.h.b16 %v490
          %v1374 = vunpack.c.l.b16 %v491
          %v1375 = vunpack.c.h.b16 %v491
          %v1376 = vunpack.c.l.b16 %v492
          %v1377 = vunpack.c.h.b16 %v492
          %v1378 = vunpack.c.l.b16 %v493
          %v1379 = vunpack.c.h.b16 %v493
          %v1380 = vunpack.c.l.b16 %v494
          %v1381 = vunpack.c.h.b16 %v494
          %v1382 = vunpack.c.l.b16 %v495
          %v1383 = vunpack.c.h.b16 %v495
          %v1384 = vunpack.c.l.b16 %v496
          %v1385 = vunpack.c.h.b16 %v496
          %v1386 = vunpack.c.l.b16 %v497
          %v1387 = vunpack.c.h.b16 %v497
          %v1388 = vunpack.c.l.b16 %v498
          %v1389 = vunpack.c.h.b16 %v498
          %v1390 = vunpack.c.l.b16 %v499
          %v1391 = vunpack.c.h.b16 %v499
          %v1392 = vunpack.c.l.b16 %v500
          %v1393 = vunpack.c.h.b16 %v500
          %v1394 = vunpack.c.l.b16 %v501
          %v1395 = vunpack.c.h.b16 %v501
          %v1396 = vunpack.c.l.b16 %v502
          %v1397 = vunpack.c.h.b16 %v502
          %v1398 = vunpack.c.l.b16 %v503
          %v1399 = vunpack.c.h.b16 %v503
          %v1400 = vunpack.c.l.b16 %v504
          %v1401 = vunpack.c.h.b16 %v504
          %v1402 = vunpack.c.l.b16 %v505
          %v1403 = vunpack.c.h.b16 %v505
          %v1404 = vunpack.c.l.b16 %v506
          %v1405 = vunpack.c.h.b16 %v506
          %v1406 = vunpack.c.l.b16 %v507
          %v1407 = vunpack.c.h.b16 %v507
          %v1408 = vunpack.c.l.b16 %v508
          %v1409 = vunpack.c.h.b16 %v508
          %v1410 = vunpack.c.l.b16 %v509
          %v1411 = vunpack.c.h.b16 %v509
          %v1412 = vunpack.c.l.b16 %v510
          %v1413 = vunpack.c.h.b16 %v510
          %v1414 = vunpack.c.l.b16 %v511
          %v1415 = vunpack.c.h.b16 %v511
          %v1416 = vunpack.c.l.b16 %v512
          %v1417 = vunpack.c.h.b16 %v512
          %v1418 = vunpack.c.l.b16 %v513
          %v1419 = vunpack.c.h.b16 %v513
          %v1420 = vunpack.c.l.b16 %v514
          %v1421 = vunpack.c.h.b16 %v514
          %v1422 = vunpack.c.l.b16 %v515
          %v1423 = vunpack.c.h.b16 %v515
          %v1424 = vunpack.c.l.b16 %v516
          %v1425 = vunpack.c.h.b16 %v516
          %v1426 = vunpack.c.l.b16 %v517
          %v1427 = vunpack.c.h.b16 %v517
          %v1428 = vunpack.c.l.b16 %v518
          %v1429 = vunpack.c.h.b16 %v518
          %v1430 = vunpack.c.l.b16 %v519
          %v1431 = vunpack.c.h.b16 %v519
          %v1432 = vunpack.c.l.b16 %v520
          %v1433 = vunpack.c.h.b16 %v520
          %v1434 = vunpack.c.l.b16 %v521
          %v1435 = vunpack.c.h.b16 %v521
          %v1436 = vunpack.c.l.b16 %v522
          %v1437 = vunpack.c.h.b16 %v522
          %v1438 = vunpack.c.l.b16 %v523
          %v1439 = vunpack.c.h.b16 %v523
          %v1440 = vunpack.c.l.b16 %v524
          %v1441 = vunpack.c.h.b16 %v524
          %v1442 = vunpack.c.l.b16 %v525
          %v1443 = vunpack.c.h.b16 %v525
          %v1444 = vunpack.c.l.b16 %v526
          %v1445 = vunpack.c.h.b16 %v526
          %v1446 = vunpack.c.l.b16 %v527
          %v1447 = vunpack.c.h.b16 %v527
          %v1448 = vunpack.c.l.b16 %v528
          %v1449 = vunpack.c.h.b16 %v528
          %v1450 = vunpack.c.l.b16 %v529
          %v1451 = vunpack.c.h.b16 %v529
          %v1452 = vunpack.c.l.b16 %v530
          %v1453 = vunpack.c.h.b16 %v530
          %v1454 = vunpack.c.l.b16 %v531
          %v1455 = vunpack.c.h.b16 %v531
          %v1456 = vunpack.c.l.b16 %v532
          %v1457 = vunpack.c.h.b16 %v532
          %v1458 = vunpack.c.l.b16 %v533
          %v1459 = vunpack.c.h.b16 %v533
          %v1460 = vunpack.c.l.b16 %v534
          %v1461 = vunpack.c.h.b16 %v534
          %v1462 = vunpack.c.l.b16 %v535
          %v1463 = vunpack.c.h.b16 %v535
          %v1464 = vpack.c.b16 %v954, %v952
          %v1465 = vpack.c.b16 %v955, %v953
          %v1466 = vpack.c.b16 %v958, %v956
          %v1467 = vpack.c.b16 %v959, %v957
          %v1468 = vpack.c.b16 %v962, %v960
          %v1469 = vpack.c.b16 %v963, %v961
          %v1470 = vpack.c.b16 %v966, %v964
          %v1471 = vpack.c.b16 %v967, %v965
          %v1472 = vpack.c.b16 %v970, %v968
          %v1473 = vpack.c.b16 %v971, %v969
          %v1474 = vpack.c.b16 %v974, %v972
          %v1475 = vpack.c.b16 %v975, %v973
          %v1476 = vpack.c.b16 %v978, %v976
          %v1477 = vpack.c.b16 %v979, %v977
          %v1478 = vpack.c.b16 %v982, %v980
          %v1479 = vpack.c.b16 %v983, %v981
          %v1480 = vpack.c.b16 %v986, %v984
          %v1481 = vpack.c.b16 %v987, %v985
          %v1482 = vpack.c.b16 %v990, %v988
          %v1483 = vpack.c.b16 %v991, %v989
          %v1484 = vpack.c.b16 %v994, %v992
          %v1485 = vpack.c.b16 %v995, %v993
          %v1486 = vpack.c.b16 %v998, %v996
          %v1487 = vpack.c.b16 %v999, %v997
          %v1488 = vpack.c.b16 %v1002, %v1000
          %v1489 = vpack.c.b16 %v1003, %v1001
          %v1490 = vpack.c.b16 %v1006, %v1004
          %v1491 = vpack.c.b16 %v1007, %v1005
          %v1492 = vpack.c.b16 %v1010, %v1008
          %v1493 = vpack.c.b16 %v1011, %v1009
          %v1494 = vpack.c.b16 %v1014, %v1012
          %v1495 = vpack.c.b16 %v1015, %v1013
          %v1496 = vpack.c.b16 %v1018, %v1016
          %v1497 = vpack.c.b16 %v1019, %v1017
          %v1498 = vpack.c.b16 %v1022, %v1020
          %v1499 = vpack.c.b16 %v1023, %v1021
          %v1500 = vpack.c.b16 %v1026, %v1024
          %v1501 = vpack.c.b16 %v1027, %v1025
          %v1502 = vpack.c.b16 %v1030, %v1028
          %v1503 = vpack.c.b16 %v1031, %v1029
          %v1504 = vpack.c.b16 %v1034, %v1032
          %v1505 = vpack.c.b16 %v1035, %v1033
          %v1506 = vpack.c.b16 %v1038, %v1036
          %v1507 = vpack.c.b16 %v1039, %v1037
          %v1508 = vpack.c.b16 %v1042, %v1040
          %v1509 = vpack.c.b16 %v1043, %v1041
          %v1510 = vpack.c.b16 %v1046, %v1044
          %v1511 = vpack.c.b16 %v1047, %v1045
          %v1512 = vpack.c.b16 %v1050, %v1048
          %v1513 = vpack.c.b16 %v1051, %v1049
          %v1514 = vpack.c.b16 %v1054, %v1052
          %v1515 = vpack.c.b16 %v1055, %v1053
          %v1516 = vpack.c.b16 %v1058, %v1056
          %v1517 = vpack.c.b16 %v1059, %v1057
          %v1518 = vpack.c.b16 %v1062, %v1060
          %v1519 = vpack.c.b16 %v1063, %v1061
          %v1520 = vpack.c.b16 %v1066, %v1064
          %v1521 = vpack.c.b16 %v1067, %v1065
          %v1522 = vpack.c.b16 %v1070, %v1068
          %v1523 = vpack.c.b16 %v1071, %v1069
          %v1524 = vpack.c.b16 %v1074, %v1072
          %v1525 = vpack.c.b16 %v1075, %v1073
          %v1526 = vpack.c.b16 %v1078, %v1076
          %v1527 = vpack.c.b16 %v1079, %v1077
          %v1528 = vpack.c.b16 %v1082, %v1080
          %v1529 = vpack.c.b16 %v1083, %v1081
          %v1530 = vpack.c.b16 %v1086, %v1084
          %v1531 = vpack.c.b16 %v1087, %v1085
          %v1532 = vpack.c.b16 %v1090, %v1088
          %v1533 = vpack.c.b16 %v1091, %v1089
          %v1534 = vpack.c.b16 %v1094, %v1092
          %v1535 = vpack.c.b16 %v1095, %v1093
          %v1536 = vpack.c.b16 %v1098, %v1096
          %v1537 = vpack.c.b16 %v1099, %v1097
          %v1538 = vpack.c.b16 %v1102, %v1100
          %v1539 = vpack.c.b16 %v1103, %v1101
          %v1540 = vpack.c.b16 %v1106, %v1104
          %v1541 = vpack.c.b16 %v1107, %v1105
          %v1542 = vpack.c.b16 %v1110, %v1108
          %v1543 = vpack.c.b16 %v1111, %v1109
          %v1544 = vpack.c.b16 %v1114, %v1112
          %v1545 = vpack.c.b16 %v1115, %v1113
          %v1546 = vpack.c.b16 %v1118, %v1116
          %v1547 = vpack.c.b16 %v1119, %v1117
          %v1548 = vpack.c.b16 %v1122, %v1120
          %v1549 = vpack.c.b16 %v1123, %v1121
          %v1550 = vpack.c.b16 %v1126, %v1124
          %v1551 = vpack.c.b16 %v1127, %v1125
          %v1552 = vpack.c.b16 %v1130, %v1128
          %v1553 = vpack.c.b16 %v1131, %v1129
          %v1554 = vpack.c.b16 %v1134, %v1132
          %v1555 = vpack.c.b16 %v1135, %v1133
          %v1556 = vpack.c.b16 %v1138, %v1136
          %v1557 = vpack.c.b16 %v1139, %v1137
          %v1558 = vpack.c.b16 %v1142, %v1140
          %v1559 = vpack.c.b16 %v1143, %v1141
          %v1560 = vpack.c.b16 %v1146, %v1144
          %v1561 = vpack.c.b16 %v1147, %v1145
          %v1562 = vpack.c.b16 %v1150, %v1148
          %v1563 = vpack.c.b16 %v1151, %v1149
          %v1564 = vpack.c.b16 %v1154, %v1152
          %v1565 = vpack.c.b16 %v1155, %v1153
          %v1566 = vpack.c.b16 %v1158, %v1156
          %v1567 = vpack.c.b16 %v1159, %v1157
          %v1568 = vpack.c.b16 %v1162, %v1160
          %v1569 = vpack.c.b16 %v1163, %v1161
          %v1570 = vpack.c.b16 %v1166, %v1164
          %v1571 = vpack.c.b16 %v1167, %v1165
          %v1572 = vpack.c.b16 %v1170, %v1168
          %v1573 = vpack.c.b16 %v1171, %v1169
          %v1574 = vpack.c.b16 %v1174, %v1172
          %v1575 = vpack.c.b16 %v1175, %v1173
          %v1576 = vpack.c.b16 %v1178, %v1176
          %v1577 = vpack.c.b16 %v1179, %v1177
          %v1578 = vpack.c.b16 %v1182, %v1180
          %v1579 = vpack.c.b16 %v1183, %v1181
          %v1580 = vpack.c.b16 %v1186, %v1184
          %v1581 = vpack.c.b16 %v1187, %v1185
          %v1582 = vpack.c.b16 %v1190, %v1188
          %v1583 = vpack.c.b16 %v1191, %v1189
          %v1584 = vpack.c.b16 %v1194, %v1192
          %v1585 = vpack.c.b16 %v1195, %v1193
          %v1586 = vpack.c.b16 %v1198, %v1196
          %v1587 = vpack.c.b16 %v1199, %v1197
          %v1588 = vpack.c.b16 %v1202, %v1200
          %v1589 = vpack.c.b16 %v1203, %v1201
          %v1590 = vpack.c.b16 %v1206, %v1204
          %v1591 = vpack.c.b16 %v1207, %v1205
          %v1592 = vpack.c.b16 %v1210, %v1208
          %v1593 = vpack.c.b16 %v1211, %v1209
          %v1594 = vpack.c.b16 %v1214, %v1212
          %v1595 = vpack.c.b16 %v1215, %v1213
          %v1596 = vpack.c.b16 %v1218, %v1216
          %v1597 = vpack.c.b16 %v1219, %v1217
          %v1598 = vpack.c.b16 %v1222, %v1220
          %v1599 = vpack.c.b16 %v1223, %v1221
          %v1600 = vpack.c.b16 %v1226, %v1224
          %v1601 = vpack.c.b16 %v1227, %v1225
          %v1602 = vpack.c.b16 %v1230, %v1228
          %v1603 = vpack.c.b16 %v1231, %v1229
          %v1604 = vpack.c.b16 %v1234, %v1232
          %v1605 = vpack.c.b16 %v1235, %v1233
          %v1606 = vpack.c.b16 %v1238, %v1236
          %v1607 = vpack.c.b16 %v1239, %v1237
          %v1608 = vpack.c.b16 %v1242, %v1240
          %v1609 = vpack.c.b16 %v1243, %v1241
          %v1610 = vpack.c.b16 %v1246, %v1244
          %v1611 = vpack.c.b16 %v1247, %v1245
          %v1612 = vpack.c.b16 %v1250, %v1248
          %v1613 = vpack.c.b16 %v1251, %v1249
          %v1614 = vpack.c.b16 %v1254, %v1252
          %v1615 = vpack.c.b16 %v1255, %v1253
          %v1616 = vpack.c.b16 %v1258, %v1256
          %v1617 = vpack.c.b16 %v1259, %v1257
          %v1618 = vpack.c.b16 %v1262, %v1260
          %v1619 = vpack.c.b16 %v1263, %v1261
          %v1620 = vpack.c.b16 %v1266, %v1264
          %v1621 = vpack.c.b16 %v1267, %v1265
          %v1622 = vpack.c.b16 %v1270, %v1268
          %v1623 = vpack.c.b16 %v1271, %v1269
          %v1624 = vpack.c.b16 %v1274, %v1272
          %v1625 = vpack.c.b16 %v1275, %v1273
          %v1626 = vpack.c.b16 %v1278, %v1276
          %v1627 = vpack.c.b16 %v1279, %v1277
          %v1628 = vpack.c.b16 %v1282, %v1280
          %v1629 = vpack.c.b16 %v1283, %v1281
          %v1630 = vpack.c.b16 %v1286, %v1284
          %v1631 = vpack.c.b16 %v1287, %v1285
          %v1632 = vpack.c.b16 %v1290, %v1288
          %v1633 = vpack.c.b16 %v1291, %v1289
          %v1634 = vpack.c.b16 %v1294, %v1292
          %v1635 = vpack.c.b16 %v1295, %v1293
          %v1636 = vpack.c.b16 %v1298, %v1296
          %v1637 = vpack.c.b16 %v1299, %v1297
          %v1638 = vpack.c.b16 %v1302, %v1300
          %v1639 = vpack.c.b16 %v1303, %v1301
          %v1640 = vpack.c.b16 %v1306, %v1304
          %v1641 = vpack.c.b16 %v1307, %v1305
          %v1642 = vpack.c.b16 %v1310, %v1308
          %v1643 = vpack.c.b16 %v1311, %v1309
          %v1644 = vpack.c.b16 %v1314, %v1312
          %v1645 = vpack.c.b16 %v1315, %v1313
          %v1646 = vpack.c.b16 %v1318, %v1316
          %v1647 = vpack.c.b16 %v1319, %v1317
          %v1648 = vpack.c.b16 %v1322, %v1320
          %v1649 = vpack.c.b16 %v1323, %v1321
          %v1650 = vpack.c.b16 %v1326, %v1324
          %v1651 = vpack.c.b16 %v1327, %v1325
          %v1652 = vpack.c.b16 %v1330, %v1328
          %v1653 = vpack.c.b16 %v1331, %v1329
          %v1654 = vpack.c.b16 %v1334, %v1332
          %v1655 = vpack.c.b16 %v1335, %v1333
          %v1656 = vpack.c.b16 %v1338, %v1336
          %v1657 = vpack.c.b16 %v1339, %v1337
          %v1658 = vpack.c.b16 %v1342, %v1340
          %v1659 = vpack.c.b16 %v1343, %v1341
          %v1660 = vpack.c.b16 %v1346, %v1344
          %v1661 = vpack.c.b16 %v1347, %v1345
          %v1662 = vpack.c.b16 %v1350, %v1348
          %v1663 = vpack.c.b16 %v1351, %v1349
          %v1664 = vpack.c.b16 %v1354, %v1352
          %v1665 = vpack.c.b16 %v1355, %v1353
          %v1666 = vpack.c.b16 %v1358, %v1356
          %v1667 = vpack.c.b16 %v1359, %v1357
          %v1668 = vpack.c.b16 %v1362, %v1360
          %v1669 = vpack.c.b16 %v1363, %v1361
          %v1670 = vpack.c.b16 %v1366, %v1364
          %v1671 = vpack.c.b16 %v1367, %v1365
          %v1672 = vpack.c.b16 %v1370, %v1368
          %v1673 = vpack.c.b16 %v1371, %v1369
          %v1674 = vpack.c.b16 %v1374, %v1372
          %v1675 = vpack.c.b16 %v1375, %v1373
          %v1676 = vpack.c.b16 %v1378, %v1376
          %v1677 = vpack.c.b16 %v1379, %v1377
          %v1678 = vpack.c.b16 %v1382, %v1380
          %v1679 = vpack.c.b16 %v1383, %v1381
          %v1680 = vpack.c.b16 %v1386, %v1384
          %v1681 = vpack.c.b16 %v1387, %v1385
          %v1682 = vpack.c.b16 %v1390, %v1388
          %v1683 = vpack.c.b16 %v1391, %v1389
          %v1684 = vpack.c.b16 %v1394, %v1392
          %v1685 = vpack.c.b16 %v1395, %v1393
          %v1686 = vpack.c.b16 %v1398, %v1396
          %v1687 = vpack.c.b16 %v1399, %v1397
          %v1688 = vpack.c.b16 %v1402, %v1400
          %v1689 = vpack.c.b16 %v1403, %v1401
          %v1690 = vpack.c.b16 %v1406, %v1404
          %v1691 = vpack.c.b16 %v1407, %v1405
          %v1692 = vpack.c.b16 %v1410, %v1408
          %v1693 = vpack.c.b16 %v1411, %v1409
          %v1694 = vpack.c.b16 %v1414, %v1412
          %v1695 = vpack.c.b16 %v1415, %v1413
          %v1696 = vpack.c.b16 %v1418, %v1416
          %v1697 = vpack.c.b16 %v1419, %v1417
          %v1698 = vpack.c.b16 %v1422, %v1420
          %v1699 = vpack.c.b16 %v1423, %v1421
          %v1700 = vpack.c.b16 %v1426, %v1424
          %v1701 = vpack.c.b16 %v1427, %v1425
          %v1702 = vpack.c.b16 %v1430, %v1428
          %v1703 = vpack.c.b16 %v1431, %v1429
          %v1704 = vpack.c.b16 %v1434, %v1432
          %v1705 = vpack.c.b16 %v1435, %v1433
          %v1706 = vpack.c.b16 %v1438, %v1436
          %v1707 = vpack.c.b16 %v1439, %v1437
          %v1708 = vpack.c.b16 %v1442, %v1440
          %v1709 = vpack.c.b16 %v1443, %v1441
          %v1710 = vpack.c.b16 %v1446, %v1444
          %v1711 = vpack.c.b16 %v1447, %v1445
          %v1712 = vpack.c.b16 %v1450, %v1448
          %v1713 = vpack.c.b16 %v1451, %v1449
          %v1714 = vpack.c.b16 %v1454, %v1452
          %v1715 = vpack.c.b16 %v1455, %v1453
          %v1716 = vpack.c.b16 %v1458, %v1456
          %v1717 = vpack.c.b16 %v1459, %v1457
          %v1718 = vpack.c.b16 %v1462, %v1460
          %v1719 = vpack.c.b16 %v1463, %v1461
          %1976 = vmatpush.bf16.msra.mxu0 %v1478
          %1977 = vmatpush.bf16.msra.mxu0 %v1476
          %1978 = vmatpush.bf16.msra.mxu0 %v1474
          %1979 = vmatpush.bf16.msra.mxu0 %v1472
          %1980 = vmatpush.bf16.msra.mxu0 %v1470
          %1981 = vmatpush.bf16.msra.mxu0 %v1468
          %1982 = vmatpush.bf16.msra.mxu0 %v1466
          %1983 = vmatpush.bf16.msra.mxu0 %v1464
          %1984 = vmatmul.bf16.gmra.mxu0 %v632
          %v1985 = vpop.f32.mrf.mxu0
          %v1986 = vadd.f32 0.0, %v1985
          %v1987 = vpop.f32.mrf.mxu0
          %v1988 = vadd.f32 0.0, %v1987
          %1989 = vmatmul.bf16.gmra.mxu0 %v648
          %v1990 = vpop.f32.mrf.mxu0
          %v1991 = vadd.f32 0.0, %v1990
          %v1992 = vpop.f32.mrf.mxu0
          %v1993 = vadd.f32 0.0, %v1992
          %1994 = vdwg.mxu0
          %1995 = vmatpush.bf16.msra.mxu0 %v1494
          %1996 = vmatpush.bf16.msra.mxu0 %v1492
          %1997 = vmatpush.bf16.msra.mxu0 %v1490
          %1998 = vmatpush.bf16.msra.mxu0 %v1488
          %1999 = vmatpush.bf16.msra.mxu0 %v1486
          %2000 = vmatpush.bf16.msra.mxu0 %v1484
          %2001 = vmatpush.bf16.msra.mxu0 %v1482
          %2002 = vmatpush.bf16.msra.mxu0 %v1480
          %2003 = vmatmul.bf16.gmra.mxu0 %v633
          %v2004 = vpop.f32.mrf.mxu0
          %v2005 = vadd.f32 %v1986, %v2004
          %v2006 = vpop.f32.mrf.mxu0
          %v2007 = vadd.f32 %v1988, %v2006
          %2008 = vmatmul.bf16.gmra.mxu0 %v649
          %v2009 = vpop.f32.mrf.mxu0
          %v2010 = vadd.f32 %v1991, %v2009
          %v2011 = vpop.f32.mrf.mxu0
          %v2012 = vadd.f32 %v1993, %v2011
          %2013 = vdwg.mxu0
          %2014 = vmatpush.bf16.msra.mxu0 %v1510
          %2015 = vmatpush.bf16.msra.mxu0 %v1508
          %2016 = vmatpush.bf16.msra.mxu0 %v1506
          %2017 = vmatpush.bf16.msra.mxu0 %v1504
          %2018 = vmatpush.bf16.msra.mxu0 %v1502
          %2019 = vmatpush.bf16.msra.mxu0 %v1500
          %2020 = vmatpush.bf16.msra.mxu0 %v1498
          %2021 = vmatpush.bf16.msra.mxu0 %v1496
          %2022 = vmatmul.bf16.gmra.mxu0 %v634
          %v2023 = vpop.f32.mrf.mxu0
          %v2024 = vadd.f32 %v2005, %v2023
          %v2025 = vpop.f32.mrf.mxu0
          %v2026 = vadd.f32 %v2007, %v2025
          %2027 = vmatmul.bf16.gmra.mxu0 %v650
          %v2028 = vpop.f32.mrf.mxu0
          %v2029 = vadd.f32 %v2010, %v2028
          %v2030 = vpop.f32.mrf.mxu0
          %v2031 = vadd.f32 %v2012, %v2030
          %2032 = vdwg.mxu0
          %2033 = vmatpush.bf16.msra.mxu0 %v1526
          %2034 = vmatpush.bf16.msra.mxu0 %v1524
          %2035 = vmatpush.bf16.msra.mxu0 %v1522
          %2036 = vmatpush.bf16.msra.mxu0 %v1520
          %2037 = vmatpush.bf16.msra.mxu0 %v1518
          %2038 = vmatpush.bf16.msra.mxu0 %v1516
          %2039 = vmatpush.bf16.msra.mxu0 %v1514
          %2040 = vmatpush.bf16.msra.mxu0 %v1512
          %2041 = vmatmul.bf16.gmra.mxu0 %v635
          %v2042 = vpop.f32.mrf.mxu0
          %v2043 = vadd.f32 %v2024, %v2042
          %v2044 = vpop.f32.mrf.mxu0
          %v2045 = vadd.f32 %v2026, %v2044
          %2046 = vmatmul.bf16.gmra.mxu0 %v651
          %v2047 = vpop.f32.mrf.mxu0
          %v2048 = vadd.f32 %v2029, %v2047
          %v2049 = vpop.f32.mrf.mxu0
          %v2050 = vadd.f32 %v2031, %v2049
          %2051 = vdwg.mxu0
          %2052 = vmatpush.bf16.msra.mxu0 %v1542
          %2053 = vmatpush.bf16.msra.mxu0 %v1540
          %2054 = vmatpush.bf16.msra.mxu0 %v1538
          %2055 = vmatpush.bf16.msra.mxu0 %v1536
          %2056 = vmatpush.bf16.msra.mxu0 %v1534
          %2057 = vmatpush.bf16.msra.mxu0 %v1532
          %2058 = vmatpush.bf16.msra.mxu0 %v1530
          %2059 = vmatpush.bf16.msra.mxu0 %v1528
          %2060 = vmatmul.bf16.gmra.mxu0 %v636
          %v2061 = vpop.f32.mrf.mxu0
          %v2062 = vadd.f32 %v2043, %v2061
          %v2063 = vpop.f32.mrf.mxu0
          %v2064 = vadd.f32 %v2045, %v2063
          %2065 = vmatmul.bf16.gmra.mxu0 %v652
          %v2066 = vpop.f32.mrf.mxu0
          %v2067 = vadd.f32 %v2048, %v2066
          %v2068 = vpop.f32.mrf.mxu0
          %v2069 = vadd.f32 %v2050, %v2068
          %2070 = vdwg.mxu0
          %2071 = vmatpush.bf16.msra.mxu0 %v1558
          %2072 = vmatpush.bf16.msra.mxu0 %v1556
          %2073 = vmatpush.bf16.msra.mxu0 %v1554
          %2074 = vmatpush.bf16.msra.mxu0 %v1552
          %2075 = vmatpush.bf16.msra.mxu0 %v1550
          %2076 = vmatpush.bf16.msra.mxu0 %v1548
          %2077 = vmatpush.bf16.msra.mxu0 %v1546
          %2078 = vmatpush.bf16.msra.mxu0 %v1544
          %2079 = vmatmul.bf16.gmra.mxu0 %v637
          %v2080 = vpop.f32.mrf.mxu0
          %v2081 = vadd.f32 %v2062, %v2080
          %v2082 = vpop.f32.mrf.mxu0
          %v2083 = vadd.f32 %v2064, %v2082
          %2084 = vmatmul.bf16.gmra.mxu0 %v653
          %v2085 = vpop.f32.mrf.mxu0
          %v2086 = vadd.f32 %v2067, %v2085
          %v2087 = vpop.f32.mrf.mxu0
          %v2088 = vadd.f32 %v2069, %v2087
          %2089 = vdwg.mxu0
          %2090 = vmatpush.bf16.msra.mxu0 %v1574
          %2091 = vmatpush.bf16.msra.mxu0 %v1572
          %2092 = vmatpush.bf16.msra.mxu0 %v1570
          %2093 = vmatpush.bf16.msra.mxu0 %v1568
          %2094 = vmatpush.bf16.msra.mxu0 %v1566
          %2095 = vmatpush.bf16.msra.mxu0 %v1564
          %2096 = vmatpush.bf16.msra.mxu0 %v1562
          %2097 = vmatpush.bf16.msra.mxu0 %v1560
          %2098 = vmatmul.bf16.gmra.mxu0 %v638
          %v2099 = vpop.f32.mrf.mxu0
          %v2100 = vadd.f32 %v2081, %v2099
          %v2101 = vpop.f32.mrf.mxu0
          %v2102 = vadd.f32 %v2083, %v2101
          %2103 = vmatmul.bf16.gmra.mxu0 %v654
          %v2104 = vpop.f32.mrf.mxu0
          %v2105 = vadd.f32 %v2086, %v2104
          %v2106 = vpop.f32.mrf.mxu0
          %v2107 = vadd.f32 %v2088, %v2106
          %2108 = vdwg.mxu0
          %2109 = vmatpush.bf16.msra.mxu0 %v1590
          %2110 = vmatpush.bf16.msra.mxu0 %v1588
          %2111 = vmatpush.bf16.msra.mxu0 %v1586
          %2112 = vmatpush.bf16.msra.mxu0 %v1584
          %2113 = vmatpush.bf16.msra.mxu0 %v1582
          %2114 = vmatpush.bf16.msra.mxu0 %v1580
          %2115 = vmatpush.bf16.msra.mxu0 %v1578
          %2116 = vmatpush.bf16.msra.mxu0 %v1576
          %2117 = vmatmul.bf16.gmra.mxu0 %v639
          %v2118 = vpop.f32.mrf.mxu0
          %v2119 = vadd.f32 %v2100, %v2118
          %v2120 = vpop.f32.mrf.mxu0
          %v2121 = vadd.f32 %v2102, %v2120
          %2122 = vmatmul.bf16.gmra.mxu0 %v655
          %v2123 = vpop.f32.mrf.mxu0
          %v2124 = vadd.f32 %v2105, %v2123
          %v2125 = vpop.f32.mrf.mxu0
          %v2126 = vadd.f32 %v2107, %v2125
          %2127 = vdwg.mxu0
          %2128 = vmatpush.bf16.msra.mxu0 %v1606
          %2129 = vmatpush.bf16.msra.mxu0 %v1604
          %2130 = vmatpush.bf16.msra.mxu0 %v1602
          %2131 = vmatpush.bf16.msra.mxu0 %v1600
          %2132 = vmatpush.bf16.msra.mxu0 %v1598
          %2133 = vmatpush.bf16.msra.mxu0 %v1596
          %2134 = vmatpush.bf16.msra.mxu0 %v1594
          %2135 = vmatpush.bf16.msra.mxu0 %v1592
          %2136 = vmatmul.bf16.gmra.mxu0 %v640
          %v2137 = vpop.f32.mrf.mxu0
          %v2138 = vadd.f32 %v2119, %v2137
          %v2139 = vpop.f32.mrf.mxu0
          %v2140 = vadd.f32 %v2121, %v2139
          %2141 = vmatmul.bf16.gmra.mxu0 %v656
          %v2142 = vpop.f32.mrf.mxu0
          %v2143 = vadd.f32 %v2124, %v2142
          %v2144 = vpop.f32.mrf.mxu0
          %v2145 = vadd.f32 %v2126, %v2144
          %2146 = vdwg.mxu0
          %2147 = vmatpush.bf16.msra.mxu0 %v1622
          %2148 = vmatpush.bf16.msra.mxu0 %v1620
          %2149 = vmatpush.bf16.msra.mxu0 %v1618
          %2150 = vmatpush.bf16.msra.mxu0 %v1616
          %2151 = vmatpush.bf16.msra.mxu0 %v1614
          %2152 = vmatpush.bf16.msra.mxu0 %v1612
          %2153 = vmatpush.bf16.msra.mxu0 %v1610
          %2154 = vmatpush.bf16.msra.mxu0 %v1608
          %2155 = vmatmul.bf16.gmra.mxu0 %v641
          %v2156 = vpop.f32.mrf.mxu0
          %v2157 = vadd.f32 %v2138, %v2156
          %v2158 = vpop.f32.mrf.mxu0
          %v2159 = vadd.f32 %v2140, %v2158
          %2160 = vmatmul.bf16.gmra.mxu0 %v657
          %v2161 = vpop.f32.mrf.mxu0
          %v2162 = vadd.f32 %v2143, %v2161
          %v2163 = vpop.f32.mrf.mxu0
          %v2164 = vadd.f32 %v2145, %v2163
          %2165 = vdwg.mxu0
          %2166 = vmatpush.bf16.msra.mxu0 %v1638
          %2167 = vmatpush.bf16.msra.mxu0 %v1636
          %2168 = vmatpush.bf16.msra.mxu0 %v1634
          %2169 = vmatpush.bf16.msra.mxu0 %v1632
          %2170 = vmatpush.bf16.msra.mxu0 %v1630
          %2171 = vmatpush.bf16.msra.mxu0 %v1628
          %2172 = vmatpush.bf16.msra.mxu0 %v1626
          %2173 = vmatpush.bf16.msra.mxu0 %v1624
          %2174 = vmatmul.bf16.gmra.mxu0 %v642
          %v2175 = vpop.f32.mrf.mxu0
          %v2176 = vadd.f32 %v2157, %v2175
          %v2177 = vpop.f32.mrf.mxu0
          %v2178 = vadd.f32 %v2159, %v2177
          %2179 = vmatmul.bf16.gmra.mxu0 %v658
          %v2180 = vpop.f32.mrf.mxu0
          %v2181 = vadd.f32 %v2162, %v2180
          %v2182 = vpop.f32.mrf.mxu0
          %v2183 = vadd.f32 %v2164, %v2182
          %2184 = vdwg.mxu0
          %2185 = vmatpush.bf16.msra.mxu0 %v1654
          %2186 = vmatpush.bf16.msra.mxu0 %v1652
          %2187 = vmatpush.bf16.msra.mxu0 %v1650
          %2188 = vmatpush.bf16.msra.mxu0 %v1648
          %2189 = vmatpush.bf16.msra.mxu0 %v1646
          %2190 = vmatpush.bf16.msra.mxu0 %v1644
          %2191 = vmatpush.bf16.msra.mxu0 %v1642
          %2192 = vmatpush.bf16.msra.mxu0 %v1640
          %2193 = vmatmul.bf16.gmra.mxu0 %v643
          %v2194 = vpop.f32.mrf.mxu0
          %v2195 = vadd.f32 %v2176, %v2194
          %v2196 = vpop.f32.mrf.mxu0
          %v2197 = vadd.f32 %v2178, %v2196
          %2198 = vmatmul.bf16.gmra.mxu0 %v659
          %v2199 = vpop.f32.mrf.mxu0
          %v2200 = vadd.f32 %v2181, %v2199
          %v2201 = vpop.f32.mrf.mxu0
          %v2202 = vadd.f32 %v2183, %v2201
          %2203 = vdwg.mxu0
          %2204 = vmatpush.bf16.msra.mxu0 %v1670
          %2205 = vmatpush.bf16.msra.mxu0 %v1668
          %2206 = vmatpush.bf16.msra.mxu0 %v1666
          %2207 = vmatpush.bf16.msra.mxu0 %v1664
          %2208 = vmatpush.bf16.msra.mxu0 %v1662
          %2209 = vmatpush.bf16.msra.mxu0 %v1660
          %2210 = vmatpush.bf16.msra.mxu0 %v1658
          %2211 = vmatpush.bf16.msra.mxu0 %v1656
          %2212 = vmatmul.bf16.gmra.mxu0 %v644
          %v2213 = vpop.f32.mrf.mxu0
          %v2214 = vadd.f32 %v2195, %v2213
          %v2215 = vpop.f32.mrf.mxu0
          %v2216 = vadd.f32 %v2197, %v2215
          %2217 = vmatmul.bf16.gmra.mxu0 %v660
          %v2218 = vpop.f32.mrf.mxu0
          %v2219 = vadd.f32 %v2200, %v2218
          %v2220 = vpop.f32.mrf.mxu0
          %v2221 = vadd.f32 %v2202, %v2220
          %2222 = vdwg.mxu0
          %2223 = vmatpush.bf16.msra.mxu0 %v1686
          %2224 = vmatpush.bf16.msra.mxu0 %v1684
          %2225 = vmatpush.bf16.msra.mxu0 %v1682
          %2226 = vmatpush.bf16.msra.mxu0 %v1680
          %2227 = vmatpush.bf16.msra.mxu0 %v1678
          %2228 = vmatpush.bf16.msra.mxu0 %v1676
          %2229 = vmatpush.bf16.msra.mxu0 %v1674
          %2230 = vmatpush.bf16.msra.mxu0 %v1672
          %2231 = vmatmul.bf16.gmra.mxu0 %v645
          %v2232 = vpop.f32.mrf.mxu0
          %v2233 = vadd.f32 %v2214, %v2232
          %v2234 = vpop.f32.mrf.mxu0
          %v2235 = vadd.f32 %v2216, %v2234
          %2236 = vmatmul.bf16.gmra.mxu0 %v661
          %v2237 = vpop.f32.mrf.mxu0
          %v2238 = vadd.f32 %v2219, %v2237
          %v2239 = vpop.f32.mrf.mxu0
          %v2240 = vadd.f32 %v2221, %v2239
          %2241 = vdwg.mxu0
          %2242 = vmatpush.bf16.msra.mxu0 %v1702
          %2243 = vmatpush.bf16.msra.mxu0 %v1700
          %2244 = vmatpush.bf16.msra.mxu0 %v1698
          %2245 = vmatpush.bf16.msra.mxu0 %v1696
          %2246 = vmatpush.bf16.msra.mxu0 %v1694
          %2247 = vmatpush.bf16.msra.mxu0 %v1692
          %2248 = vmatpush.bf16.msra.mxu0 %v1690
          %2249 = vmatpush.bf16.msra.mxu0 %v1688
          %2250 = vmatmul.bf16.gmra.mxu0 %v646
          %v2251 = vpop.f32.mrf.mxu0
          %v2252 = vadd.f32 %v2233, %v2251
          %v2253 = vpop.f32.mrf.mxu0
          %v2254 = vadd.f32 %v2235, %v2253
          %2255 = vmatmul.bf16.gmra.mxu0 %v662
          %v2256 = vpop.f32.mrf.mxu0
          %v2257 = vadd.f32 %v2238, %v2256
          %v2258 = vpop.f32.mrf.mxu0
          %v2259 = vadd.f32 %v2240, %v2258
          %2260 = vdwg.mxu0
          %2261 = vmatpush.bf16.msra.mxu0 %v1718
          %2262 = vmatpush.bf16.msra.mxu0 %v1716
          %2263 = vmatpush.bf16.msra.mxu0 %v1714
          %2264 = vmatpush.bf16.msra.mxu0 %v1712
          %2265 = vmatpush.bf16.msra.mxu0 %v1710
          %2266 = vmatpush.bf16.msra.mxu0 %v1708
          %2267 = vmatpush.bf16.msra.mxu0 %v1706
          %2268 = vmatpush.bf16.msra.mxu0 %v1704
          %2269 = vmatmul.bf16.gmra.mxu0 %v647
          %v2270 = vpop.f32.mrf.mxu0
          %v2271 = vadd.f32 %v2252, %v2270
          %v2272 = vpop.f32.mrf.mxu0
          %v2273 = vadd.f32 %v2254, %v2272
          %2274 = vmatmul.bf16.gmra.mxu0 %v663
          %v2275 = vpop.f32.mrf.mxu0
          %v2276 = vadd.f32 %v2257, %v2275
          %v2277 = vpop.f32.mrf.mxu0
          %v2278 = vadd.f32 %v2259, %v2277
          %2279 = vdwg.mxu0
          %2280 = vmatpush.bf16.msra.mxu0 %v1479
          %2281 = vmatpush.bf16.msra.mxu0 %v1477
          %2282 = vmatpush.bf16.msra.mxu0 %v1475
          %2283 = vmatpush.bf16.msra.mxu0 %v1473
          %2284 = vmatpush.bf16.msra.mxu0 %v1471
          %2285 = vmatpush.bf16.msra.mxu0 %v1469
          %2286 = vmatpush.bf16.msra.mxu0 %v1467
          %2287 = vmatpush.bf16.msra.mxu0 %v1465
          %2288 = vmatmul.bf16.gmra.mxu0 %v632
          %v2289 = vpop.f32.mrf.mxu0
          %v2290 = vadd.f32 0.0, %v2289
          %v2291 = vpop.f32.mrf.mxu0
          %v2292 = vadd.f32 0.0, %v2291
          %2293 = vmatmul.bf16.gmra.mxu0 %v648
          %v2294 = vpop.f32.mrf.mxu0
          %v2295 = vadd.f32 0.0, %v2294
          %v2296 = vpop.f32.mrf.mxu0
          %v2297 = vadd.f32 0.0, %v2296
          %2298 = vdwg.mxu0
          %2299 = vmatpush.bf16.msra.mxu0 %v1495
          %2300 = vmatpush.bf16.msra.mxu0 %v1493
          %2301 = vmatpush.bf16.msra.mxu0 %v1491
          %2302 = vmatpush.bf16.msra.mxu0 %v1489
          %2303 = vmatpush.bf16.msra.mxu0 %v1487
          %2304 = vmatpush.bf16.msra.mxu0 %v1485
          %2305 = vmatpush.bf16.msra.mxu0 %v1483
          %2306 = vmatpush.bf16.msra.mxu0 %v1481
          %2307 = vmatmul.bf16.gmra.mxu0 %v633
          %v2308 = vpop.f32.mrf.mxu0
          %v2309 = vadd.f32 %v2290, %v2308
          %v2310 = vpop.f32.mrf.mxu0
          %v2311 = vadd.f32 %v2292, %v2310
          %2312 = vmatmul.bf16.gmra.mxu0 %v649
          %v2313 = vpop.f32.mrf.mxu0
          %v2314 = vadd.f32 %v2295, %v2313
          %v2315 = vpop.f32.mrf.mxu0
          %v2316 = vadd.f32 %v2297, %v2315
          %2317 = vdwg.mxu0
          %2318 = vmatpush.bf16.msra.mxu0 %v1511
          %2319 = vmatpush.bf16.msra.mxu0 %v1509
          %2320 = vmatpush.bf16.msra.mxu0 %v1507
          %2321 = vmatpush.bf16.msra.mxu0 %v1505
          %2322 = vmatpush.bf16.msra.mxu0 %v1503
          %2323 = vmatpush.bf16.msra.mxu0 %v1501
          %2324 = vmatpush.bf16.msra.mxu0 %v1499
          %2325 = vmatpush.bf16.msra.mxu0 %v1497
          %2326 = vmatmul.bf16.gmra.mxu0 %v634
          %v2327 = vpop.f32.mrf.mxu0
          %v2328 = vadd.f32 %v2309, %v2327
          %v2329 = vpop.f32.mrf.mxu0
          %v2330 = vadd.f32 %v2311, %v2329
          %2331 = vmatmul.bf16.gmra.mxu0 %v650
          %v2332 = vpop.f32.mrf.mxu0
          %v2333 = vadd.f32 %v2314, %v2332
          %v2334 = vpop.f32.mrf.mxu0
          %v2335 = vadd.f32 %v2316, %v2334
          %2336 = vdwg.mxu0
          %2337 = vmatpush.bf16.msra.mxu0 %v1527
          %2338 = vmatpush.bf16.msra.mxu0 %v1525
          %2339 = vmatpush.bf16.msra.mxu0 %v1523
          %2340 = vmatpush.bf16.msra.mxu0 %v1521
          %2341 = vmatpush.bf16.msra.mxu0 %v1519
          %2342 = vmatpush.bf16.msra.mxu0 %v1517
          %2343 = vmatpush.bf16.msra.mxu0 %v1515
          %2344 = vmatpush.bf16.msra.mxu0 %v1513
          %2345 = vmatmul.bf16.gmra.mxu0 %v635
          %v2346 = vpop.f32.mrf.mxu0
          %v2347 = vadd.f32 %v2328, %v2346
          %v2348 = vpop.f32.mrf.mxu0
          %v2349 = vadd.f32 %v2330, %v2348
          %2350 = vmatmul.bf16.gmra.mxu0 %v651
          %v2351 = vpop.f32.mrf.mxu0
          %v2352 = vadd.f32 %v2333, %v2351
          %v2353 = vpop.f32.mrf.mxu0
          %v2354 = vadd.f32 %v2335, %v2353
          %2355 = vdwg.mxu0
          %2356 = vmatpush.bf16.msra.mxu0 %v1543
          %2357 = vmatpush.bf16.msra.mxu0 %v1541
          %2358 = vmatpush.bf16.msra.mxu0 %v1539
          %2359 = vmatpush.bf16.msra.mxu0 %v1537
          %2360 = vmatpush.bf16.msra.mxu0 %v1535
          %2361 = vmatpush.bf16.msra.mxu0 %v1533
          %2362 = vmatpush.bf16.msra.mxu0 %v1531
          %2363 = vmatpush.bf16.msra.mxu0 %v1529
          %2364 = vmatmul.bf16.gmra.mxu0 %v636
          %v2365 = vpop.f32.mrf.mxu0
          %v2366 = vadd.f32 %v2347, %v2365
          %v2367 = vpop.f32.mrf.mxu0
          %v2368 = vadd.f32 %v2349, %v2367
          %2369 = vmatmul.bf16.gmra.mxu0 %v652
          %v2370 = vpop.f32.mrf.mxu0
          %v2371 = vadd.f32 %v2352, %v2370
          %v2372 = vpop.f32.mrf.mxu0
          %v2373 = vadd.f32 %v2354, %v2372
          %2374 = vdwg.mxu0
          %2375 = vmatpush.bf16.msra.mxu0 %v1559
          %2376 = vmatpush.bf16.msra.mxu0 %v1557
          %2377 = vmatpush.bf16.msra.mxu0 %v1555
          %2378 = vmatpush.bf16.msra.mxu0 %v1553
          %2379 = vmatpush.bf16.msra.mxu0 %v1551
          %2380 = vmatpush.bf16.msra.mxu0 %v1549
          %2381 = vmatpush.bf16.msra.mxu0 %v1547
          %2382 = vmatpush.bf16.msra.mxu0 %v1545
          %2383 = vmatmul.bf16.gmra.mxu0 %v637
          %v2384 = vpop.f32.mrf.mxu0
          %v2385 = vadd.f32 %v2366, %v2384
          %v2386 = vpop.f32.mrf.mxu0
          %v2387 = vadd.f32 %v2368, %v2386
          %2388 = vmatmul.bf16.gmra.mxu0 %v653
          %v2389 = vpop.f32.mrf.mxu0
          %v2390 = vadd.f32 %v2371, %v2389
          %v2391 = vpop.f32.mrf.mxu0
          %v2392 = vadd.f32 %v2373, %v2391
          %2393 = vdwg.mxu0
          %2394 = vmatpush.bf16.msra.mxu0 %v1575
          %2395 = vmatpush.bf16.msra.mxu0 %v1573
          %2396 = vmatpush.bf16.msra.mxu0 %v1571
          %2397 = vmatpush.bf16.msra.mxu0 %v1569
          %2398 = vmatpush.bf16.msra.mxu0 %v1567
          %2399 = vmatpush.bf16.msra.mxu0 %v1565
          %2400 = vmatpush.bf16.msra.mxu0 %v1563
          %2401 = vmatpush.bf16.msra.mxu0 %v1561
          %2402 = vmatmul.bf16.gmra.mxu0 %v638
          %v2403 = vpop.f32.mrf.mxu0
          %v2404 = vadd.f32 %v2385, %v2403
          %v2405 = vpop.f32.mrf.mxu0
          %v2406 = vadd.f32 %v2387, %v2405
          %2407 = vmatmul.bf16.gmra.mxu0 %v654
          %v2408 = vpop.f32.mrf.mxu0
          %v2409 = vadd.f32 %v2390, %v2408
          %v2410 = vpop.f32.mrf.mxu0
          %v2411 = vadd.f32 %v2392, %v2410
          %2412 = vdwg.mxu0
          %2413 = vmatpush.bf16.msra.mxu0 %v1591
          %2414 = vmatpush.bf16.msra.mxu0 %v1589
          %2415 = vmatpush.bf16.msra.mxu0 %v1587
          %2416 = vmatpush.bf16.msra.mxu0 %v1585
          %2417 = vmatpush.bf16.msra.mxu0 %v1583
          %2418 = vmatpush.bf16.msra.mxu0 %v1581
          %2419 = vmatpush.bf16.msra.mxu0 %v1579
          %2420 = vmatpush.bf16.msra.mxu0 %v1577
          %2421 = vmatmul.bf16.gmra.mxu0 %v639
          %v2422 = vpop.f32.mrf.mxu0
          %v2423 = vadd.f32 %v2404, %v2422
          %v2424 = vpop.f32.mrf.mxu0
          %v2425 = vadd.f32 %v2406, %v2424
          %2426 = vmatmul.bf16.gmra.mxu0 %v655
          %v2427 = vpop.f32.mrf.mxu0
          %v2428 = vadd.f32 %v2409, %v2427
          %v2429 = vpop.f32.mrf.mxu0
          %v2430 = vadd.f32 %v2411, %v2429
          %2431 = vdwg.mxu0
          %2432 = vmatpush.bf16.msra.mxu0 %v1607
          %2433 = vmatpush.bf16.msra.mxu0 %v1605
          %2434 = vmatpush.bf16.msra.mxu0 %v1603
          %2435 = vmatpush.bf16.msra.mxu0 %v1601
          %2436 = vmatpush.bf16.msra.mxu0 %v1599
          %2437 = vmatpush.bf16.msra.mxu0 %v1597
          %2438 = vmatpush.bf16.msra.mxu0 %v1595
          %2439 = vmatpush.bf16.msra.mxu0 %v1593
          %2440 = vmatmul.bf16.gmra.mxu0 %v640
          %v2441 = vpop.f32.mrf.mxu0
          %v2442 = vadd.f32 %v2423, %v2441
          %v2443 = vpop.f32.mrf.mxu0
          %v2444 = vadd.f32 %v2425, %v2443
          %2445 = vmatmul.bf16.gmra.mxu0 %v656
          %v2446 = vpop.f32.mrf.mxu0
          %v2447 = vadd.f32 %v2428, %v2446
          %v2448 = vpop.f32.mrf.mxu0
          %v2449 = vadd.f32 %v2430, %v2448
          %2450 = vdwg.mxu0
          %2451 = vmatpush.bf16.msra.mxu0 %v1623
          %2452 = vmatpush.bf16.msra.mxu0 %v1621
          %2453 = vmatpush.bf16.msra.mxu0 %v1619
          %2454 = vmatpush.bf16.msra.mxu0 %v1617
          %2455 = vmatpush.bf16.msra.mxu0 %v1615
          %2456 = vmatpush.bf16.msra.mxu0 %v1613
          %2457 = vmatpush.bf16.msra.mxu0 %v1611
          %2458 = vmatpush.bf16.msra.mxu0 %v1609
          %2459 = vmatmul.bf16.gmra.mxu0 %v641
          %v2460 = vpop.f32.mrf.mxu0
          %v2461 = vadd.f32 %v2442, %v2460
          %v2462 = vpop.f32.mrf.mxu0
          %v2463 = vadd.f32 %v2444, %v2462
          %2464 = vmatmul.bf16.gmra.mxu0 %v657
          %v2465 = vpop.f32.mrf.mxu0
          %v2466 = vadd.f32 %v2447, %v2465
          %v2467 = vpop.f32.mrf.mxu0
          %v2468 = vadd.f32 %v2449, %v2467
          %2469 = vdwg.mxu0
          %2470 = vmatpush.bf16.msra.mxu0 %v1639
          %2471 = vmatpush.bf16.msra.mxu0 %v1637
          %2472 = vmatpush.bf16.msra.mxu0 %v1635
          %2473 = vmatpush.bf16.msra.mxu0 %v1633
          %2474 = vmatpush.bf16.msra.mxu0 %v1631
          %2475 = vmatpush.bf16.msra.mxu0 %v1629
          %2476 = vmatpush.bf16.msra.mxu0 %v1627
          %2477 = vmatpush.bf16.msra.mxu0 %v1625
          %2478 = vmatmul.bf16.gmra.mxu0 %v642
          %v2479 = vpop.f32.mrf.mxu0
          %v2480 = vadd.f32 %v2461, %v2479
          %v2481 = vpop.f32.mrf.mxu0
          %v2482 = vadd.f32 %v2463, %v2481
          %2483 = vmatmul.bf16.gmra.mxu0 %v658
          %v2484 = vpop.f32.mrf.mxu0
          %v2485 = vadd.f32 %v2466, %v2484
          %v2486 = vpop.f32.mrf.mxu0
          %v2487 = vadd.f32 %v2468, %v2486
          %2488 = vdwg.mxu0
          %2489 = vmatpush.bf16.msra.mxu0 %v1655
          %2490 = vmatpush.bf16.msra.mxu0 %v1653
          %2491 = vmatpush.bf16.msra.mxu0 %v1651
          %2492 = vmatpush.bf16.msra.mxu0 %v1649
          %2493 = vmatpush.bf16.msra.mxu0 %v1647
          %2494 = vmatpush.bf16.msra.mxu0 %v1645
          %2495 = vmatpush.bf16.msra.mxu0 %v1643
          %2496 = vmatpush.bf16.msra.mxu0 %v1641
          %2497 = vmatmul.bf16.gmra.mxu0 %v643
          %v2498 = vpop.f32.mrf.mxu0
          %v2499 = vadd.f32 %v2480, %v2498
          %v2500 = vpop.f32.mrf.mxu0
          %v2501 = vadd.f32 %v2482, %v2500
          %2502 = vmatmul.bf16.gmra.mxu0 %v659
          %v2503 = vpop.f32.mrf.mxu0
          %v2504 = vadd.f32 %v2485, %v2503
          %v2505 = vpop.f32.mrf.mxu0
          %v2506 = vadd.f32 %v2487, %v2505
          %2507 = vdwg.mxu0
          %2508 = vmatpush.bf16.msra.mxu0 %v1671
          %2509 = vmatpush.bf16.msra.mxu0 %v1669
          %2510 = vmatpush.bf16.msra.mxu0 %v1667
          %2511 = vmatpush.bf16.msra.mxu0 %v1665
          %2512 = vmatpush.bf16.msra.mxu0 %v1663
          %2513 = vmatpush.bf16.msra.mxu0 %v1661
          %2514 = vmatpush.bf16.msra.mxu0 %v1659
          %2515 = vmatpush.bf16.msra.mxu0 %v1657
          %2516 = vmatmul.bf16.gmra.mxu0 %v644
          %v2517 = vpop.f32.mrf.mxu0
          %v2518 = vadd.f32 %v2499, %v2517
          %v2519 = vpop.f32.mrf.mxu0
          %v2520 = vadd.f32 %v2501, %v2519
          %2521 = vmatmul.bf16.gmra.mxu0 %v660
          %v2522 = vpop.f32.mrf.mxu0
          %v2523 = vadd.f32 %v2504, %v2522
          %v2524 = vpop.f32.mrf.mxu0
          %v2525 = vadd.f32 %v2506, %v2524
          %2526 = vdwg.mxu0
          %2527 = vmatpush.bf16.msra.mxu0 %v1687
          %2528 = vmatpush.bf16.msra.mxu0 %v1685
          %2529 = vmatpush.bf16.msra.mxu0 %v1683
          %2530 = vmatpush.bf16.msra.mxu0 %v1681
          %2531 = vmatpush.bf16.msra.mxu0 %v1679
          %2532 = vmatpush.bf16.msra.mxu0 %v1677
          %2533 = vmatpush.bf16.msra.mxu0 %v1675
          %2534 = vmatpush.bf16.msra.mxu0 %v1673
          %2535 = vmatmul.bf16.gmra.mxu0 %v645
          %v2536 = vpop.f32.mrf.mxu0
          %v2537 = vadd.f32 %v2518, %v2536
          %v2538 = vpop.f32.mrf.mxu0
          %v2539 = vadd.f32 %v2520, %v2538
          %2540 = vmatmul.bf16.gmra.mxu0 %v661
          %v2541 = vpop.f32.mrf.mxu0
          %v2542 = vadd.f32 %v2523, %v2541
          %v2543 = vpop.f32.mrf.mxu0
          %v2544 = vadd.f32 %v2525, %v2543
          %2545 = vdwg.mxu0
          %2546 = vmatpush.bf16.msra.mxu0 %v1703
          %2547 = vmatpush.bf16.msra.mxu0 %v1701
          %2548 = vmatpush.bf16.msra.mxu0 %v1699
          %2549 = vmatpush.bf16.msra.mxu0 %v1697
          %2550 = vmatpush.bf16.msra.mxu0 %v1695
          %2551 = vmatpush.bf16.msra.mxu0 %v1693
          %2552 = vmatpush.bf16.msra.mxu0 %v1691
          %2553 = vmatpush.bf16.msra.mxu0 %v1689
          %2554 = vmatmul.bf16.gmra.mxu0 %v646
          %v2555 = vpop.f32.mrf.mxu0
          %v2556 = vadd.f32 %v2537, %v2555
          %v2557 = vpop.f32.mrf.mxu0
          %v2558 = vadd.f32 %v2539, %v2557
          %2559 = vmatmul.bf16.gmra.mxu0 %v662
          %v2560 = vpop.f32.mrf.mxu0
          %v2561 = vadd.f32 %v2542, %v2560
          %v2562 = vpop.f32.mrf.mxu0
          %v2563 = vadd.f32 %v2544, %v2562
          %2564 = vdwg.mxu0
          %2565 = vmatpush.bf16.msra.mxu0 %v1719
          %2566 = vmatpush.bf16.msra.mxu0 %v1717
          %2567 = vmatpush.bf16.msra.mxu0 %v1715
          %2568 = vmatpush.bf16.msra.mxu0 %v1713
          %2569 = vmatpush.bf16.msra.mxu0 %v1711
          %2570 = vmatpush.bf16.msra.mxu0 %v1709
          %2571 = vmatpush.bf16.msra.mxu0 %v1707
          %2572 = vmatpush.bf16.msra.mxu0 %v1705
          %2573 = vmatmul.bf16.gmra.mxu0 %v647
          %v2574 = vpop.f32.mrf.mxu0
          %v2575 = vadd.f32 %v2556, %v2574
          %v2576 = vpop.f32.mrf.mxu0
          %v2577 = vadd.f32 %v2558, %v2576
          %2578 = vmatmul.bf16.gmra.mxu0 %v663
          %v2579 = vpop.f32.mrf.mxu0
          %v2580 = vadd.f32 %v2561, %v2579
          %v2581 = vpop.f32.mrf.mxu0
          %v2582 = vadd.f32 %v2563, %v2581
          %2583 = vdwg.mxu0
          %v2584 = vld [vmem:[#allocation2] sm:$0x3]
          %v2585 = vadd.f32 %v2271, %v2273
          %v2586 = vadd.f32 %v2585, %v2276
          %v2587 = vadd.f32 %v2586, %v2278
          %v2588 = vrot.slane %v2587, 4
          %v2589 = vadd.f32 %v2587, %v2588
          %v2590 = vrot.slane %v2589, 2
          %v2591 = vadd.f32 %v2589, %v2590
          %v2592 = vrot.slane %v2591, 1
          %v2593 = vadd.f32 %v2591, %v2592
          %v2594 = vadd.f32 %v2575, %v2577
          %v2595 = vadd.f32 %v2594, %v2580
          %v2596 = vadd.f32 %v2595, %v2582
          %v2597 = vrot.slane %v2596, 4
          %v2598 = vadd.f32 %v2596, %v2597
          %v2599 = vrot.slane %v2598, 2
          %v2600 = vadd.f32 %v2598, %v2599
          %v2601 = vrot.slane %v2600, 1
          %v2602 = vadd.f32 %v2600, %v2601
          %v2605 = vrot.slane %v2602, 7
          %vm2606 = vcmask 1040384
          %v2607 = vsel %vm2606, %v2593, %v2605
          %v2609 = vadd.f32 %v2584, %v2607
          %v2610 = vlaneseq
          %vm2611 = vcmp.ge.s32.totalorder %v2610, 0
          %vm2612 = vcmp.lt.s32.totalorder %v2610, 256
          %vm2613 = vmand %vm2611, %vm2612
          %2614 = vst.msk [vmem:[#allocation2] sm:$0x3] %vm2613, %v2609
          %v2615 = vld [vmem:[#allocation3] sm:$0x3]
          %v2616 = vmul.f32 %v2271, %v2271
          %v2617 = vmul.f32 %v2575, %v2575
          %v2618 = vmul.f32 %v2273, %v2273
          %v2619 = vmul.f32 %v2577, %v2577
          %v2620 = vmul.f32 %v2276, %v2276
          %v2621 = vmul.f32 %v2580, %v2580
          %v2622 = vmul.f32 %v2278, %v2278
          %v2623 = vmul.f32 %v2582, %v2582
          %v2624 = vadd.f32 %v2616, %v2618
          %v2625 = vadd.f32 %v2624, %v2620
          %v2626 = vadd.f32 %v2625, %v2622
          %v2627 = vrot.slane %v2626, 4
          %v2628 = vadd.f32 %v2626, %v2627
          %v2629 = vrot.slane %v2628, 2
          %v2630 = vadd.f32 %v2628, %v2629
          %v2631 = vrot.slane %v2630, 1
          %v2632 = vadd.f32 %v2630, %v2631
          %v2633 = vadd.f32 %v2617, %v2619
          %v2634 = vadd.f32 %v2633, %v2621
          %v2635 = vadd.f32 %v2634, %v2623
          %v2636 = vrot.slane %v2635, 4
          %v2637 = vadd.f32 %v2635, %v2636
          %v2638 = vrot.slane %v2637, 2
          %v2639 = vadd.f32 %v2637, %v2638
          %v2640 = vrot.slane %v2639, 1
          %v2641 = vadd.f32 %v2639, %v2640
          %v2644 = vrot.slane %v2641, 7
          %v2645 = vsel %vm2606, %v2632, %v2644
          %v2647 = vadd.f32 %v2615, %v2645
          %2648 = vst.msk [vmem:[#allocation3] sm:$0x3] %vm2613, %v2647
          %v2649 = vpack.c.bf16 %v2575, %v2271
          %v2650 = vpack.c.bf16 %v2577, %v2273
          %v2651 = vpack.c.bf16 %v2580, %v2276
          %v2652 = vpack.c.bf16 %v2582, %v2278
          %s2653 = smul.u32 %s24, 32
          %s2654 = sshra.s32 %s2653, 3
          %s2655 = sand.u32 %s2653, 7
          %s2656 = smul.u32 %s2654, 2
          %s2657 = smul.addr %s2656, 4
          %s2658 = scalar_lea.vmem [#allocation4], %s2657
          %2659 = vst [vmem:[%s2658] sm:$0xff] %v2649
          %2660 = vst [vmem:[%s2658 + $0x8] sm:$0xff] %v2650
          %2661 = vst [vmem:[%s2658 + $0x10] sm:$0xff] %v2651
          %2662 = vst [vmem:[%s2658 + $0x18] sm:$0xff] %v2652
        $region48: #{tpu_custom_call.1} parent=31 // pred_fallthru
          _
        %p2663 = scmp.eq.s32.totalorder %s23, 1
        // Predicated region
        $region53: #{tpu_custom_call.1} parent=31 // pred_check
          %p2664 = pneg %p2663
        $region54: #{tpu_custom_call.1} parent=31 // pred_check_branch
          %2666 = sbr.rel (%p2664) target = $region56
        $region55: #{tpu_custom_call.1} parent=31 // pred_region
          %v2667 = vld [vmem:[#allocation2] sm:$0x3]
          %v2668 = vmul.f32 %v2667, 0.03125
          %v2669 = vld [vmem:[#allocation3] sm:$0x3]
          %v2670 = vmul.f32 %v2669, 0.03125
          %v2671 = vmul.f32 %v2668, %v2668
          %v2672 = vsub.f32 %v2670, %v2671
          %v2673 = vmax.f32 %v2672, 0.0
          %v2674 = vadd.f32 %v2673, 1e-05
          %v2675 = vrsqrt.pop %v2674
          %v2676 = vmul.f32 %v2675, %v2674
          %v2677 = vmul.f32 %v2676, %v2675
          %v2678 = vmul.f32 0.5, %v2677
          %v2679 = vsub.f32 1.5, %v2678
          %v2680 = vmul.f32 %v2675, %v2679
          %vm2681 = vweird.f32 %v2674
          %vm2682 = vweird.f32 %v2675
          %vm2683 = vmor %vm2681, %vm2682
          %v2684 = vsel %vm2683, %v2675, %v2680
          %s2685 = smul.u32 %s24, 32
          %s2686 = sshra.s32 %s2685, 3
          %s2687 = sand.u32 %s2685, 7
          %s2688 = smul.u32 %s2686, 2
          %s2689 = smul.addr %s2688, 4
          %s2690 = scalar_lea.vmem [#allocation4], %s2689
          %v2691 = vld [vmem:[%s2690] sm:$0xff]
          %v2692 = vld [vmem:[%s2690 + $0x8] sm:$0xff]
          %v2693 = vld [vmem:[%s2690 + $0x10] sm:$0xff]
          %v2694 = vld [vmem:[%s2690 + $0x18] sm:$0xff]
          %v2695 = vunpack.c.l.bf16 %v2691
          %v2696 = vunpack.c.h.bf16 %v2691
          %v2697 = vunpack.c.l.bf16 %v2692
          %v2698 = vunpack.c.h.bf16 %v2692
          %v2699 = vunpack.c.l.bf16 %v2693
          %v2700 = vunpack.c.h.bf16 %v2693
          %v2701 = vunpack.c.l.bf16 %v2694
          %v2702 = vunpack.c.h.bf16 %v2694
          %v2704 = vperm.slane %v2668, 0
          %v2705 = vperm.slane %v2668, 1
          %v2708 = vsub.f32 %v2695, %v2704
          %v2709 = vsub.f32 %v2696, %v2705
          %v2710 = vsub.f32 %v2697, %v2704
          %v2711 = vsub.f32 %v2698, %v2705
          %v2712 = vsub.f32 %v2699, %v2704
          %v2713 = vsub.f32 %v2700, %v2705
          %v2714 = vsub.f32 %v2701, %v2704
          %v2715 = vsub.f32 %v2702, %v2705
          %v2717 = vperm.slane %v2684, 0
          %v2718 = vperm.slane %v2684, 1
          %v2721 = vmul.f32 %v2708, %v2717
          %v2722 = vmul.f32 %v2709, %v2718
          %v2723 = vmul.f32 %v2710, %v2717
          %v2724 = vmul.f32 %v2711, %v2718
          %v2725 = vmul.f32 %v2712, %v2717
          %v2726 = vmul.f32 %v2713, %v2718
          %v2727 = vmul.f32 %v2714, %v2717
          %v2728 = vmul.f32 %v2715, %v2718
          %v2729 = vmax.f32 %v2721, 0.0
          %v2730 = vmax.f32 %v2722, 0.0
          %v2731 = vmax.f32 %v2723, 0.0
          %v2732 = vmax.f32 %v2724, 0.0
          %v2733 = vmax.f32 %v2725, 0.0
          %v2734 = vmax.f32 %v2726, 0.0
          %v2735 = vmax.f32 %v2727, 0.0
          %v2736 = vmax.f32 %v2728, 0.0
          %v2737 = vadd.f32 %v2729, %v2731
          %v2738 = vrot.slane %v2737, 4
          %v2739 = vadd.f32 %v2737, %v2738
          %v2740 = vrot.slane %v2739, 2
          %v2741 = vadd.f32 %v2739, %v2740
          %v2742 = vrot.slane %v2741, 1
          %v2743 = vadd.f32 %v2741, %v2742
          %v2744 = vadd.f32 %v2730, %v2732
          %v2745 = vrot.slane %v2744, 4
          %v2746 = vadd.f32 %v2744, %v2745
          %v2747 = vrot.slane %v2746, 2
          %v2748 = vadd.f32 %v2746, %v2747
          %v2749 = vrot.slane %v2748, 1
          %v2750 = vadd.f32 %v2748, %v2749
          %v2751 = vadd.f32 %v2733, %v2735
          %v2752 = vrot.slane %v2751, 4
          %v2753 = vadd.f32 %v2751, %v2752
          %v2754 = vrot.slane %v2753, 2
          %v2755 = vadd.f32 %v2753, %v2754
          %v2756 = vrot.slane %v2755, 1
          %v2757 = vadd.f32 %v2755, %v2756
          %v2758 = vadd.f32 %v2734, %v2736
          %v2759 = vrot.slane %v2758, 4
          %v2760 = vadd.f32 %v2758, %v2759
          %v2761 = vrot.slane %v2760, 2
          %v2762 = vadd.f32 %v2760, %v2761
          %v2763 = vrot.slane %v2762, 1
          %v2764 = vadd.f32 %v2762, %v2763
          %v2765 = vrcp.pop 16.0
          %v2766 = vmul.f32 16.0, %v2765
          %v2767 = vsub.f32 1.0, %v2766
          %v2768 = vmul.f32 %v2765, %v2767
          %v2769 = vadd.f32 %v2765, %v2768
          %vm2770 = vweird.f32 %v2765
          %v2771 = vsel %vm2770, %v2765, %v2769
          %v2772 = vmul.f32 %v2743, %v2771
          %v2773 = vmul.f32 %v2750, %v2771
          %v2774 = vmul.f32 %v2757, %v2771
          %v2775 = vmul.f32 %v2764, %v2771
          %s2776 = smul.u32 %s24, 2
          %v2781 = vrot.slane %v2773, 6
          %v2782 = vrot.slane %v2775, 6
          %vm2783 = vcmask 1041408
          %v2784 = vsel %vm2783, %v2772, %v2781
          %v2785 = vsel %vm2783, %v2774, %v2782
          %vm2786 = vcmask 1044484
          %v2787 = vsel %vm2786, %v2784, %v2784
          %vm2788 = vcmask 1046534
          %v2789 = vsel %vm2788, %v2784, %v2787
          %v2790 = vrot.slane %v2785, 7
          %vm2791 = vcmask 1041409
          %v2792 = vsel %vm2791, %v2790, %v2789
          %vm2793 = vcmask 1043459
          %v2794 = vsel %vm2793, %v2790, %v2792
          %vm2795 = vcmask 1045509
          %v2796 = vsel %vm2795, %v2790, %v2794
          %vm2797 = vcmask 1047559
          %v2798 = vsel %vm2797, %v2790, %v2796
          %s2800 = sshra.s32 %s2776, 1
          %s2801 = sand.u32 %s2776, 1
          %s2802 = smul.u32 %s2800, 2
          %s2803 = smul.addr %s2802, 2
          %s2804 = scalar_lea.vmem [#allocation5], %s2803
          %2805 = vst [vmem:[%s2804] sm:$0xf] %v2798
          %p2806 = scmp.eq.s32.totalorder %s24, 0
          // Predicated region
          $region57: #{tpu_custom_call.1} parent=55 // pred_check
            %p2807 = pneg %p2806
          $region58: #{tpu_custom_call.1} parent=55 // pred_check_branch
            %2809 = sbr.rel (%p2807) target = $region60
          $region59: #{tpu_custom_call.1} parent=55 // pred_region
            %v2810 = vld [vmem:[#allocation5] sm:$0xf]
            %2812 = vst [vmem:[#allocation1] ss:$4 sm:$0xff] %v2810
            %v2813 = vld.sshfl [vmem:[#allocation1] sm:$0xff pattern:$0x73625140]
            %v2814 = vld.sshfl [vmem:[#allocation1 + $0x8] sm:$0xff pattern:$0x73625140]
            %v2817 = vpack.c.bf16 %v2813, %v2813
            %v2818 = vpack.c.bf16 %v2814, %v2814
            %v2819 = vld [vmem:[#allocation11] sm:$0xf]
            %v2820 = vld [vmem:[#allocation11 + $0x4] sm:$0xf]
            %v2821 = vld [vmem:[#allocation11 + $0x8] sm:$0xf]
            %v2822 = vld [vmem:[#allocation11 + $0xc] sm:$0xf]
            %v2823 = vld [vmem:[#allocation11 + $0x10] sm:$0xf]
            %v2824 = vld [vmem:[#allocation11 + $0x14] sm:$0xf]
            %v2825 = vld [vmem:[#allocation11 + $0x18] sm:$0xf]
            %v2826 = vld [vmem:[#allocation11 + $0x1c] sm:$0xf]
            %v2827 = vld [vmem:[#allocation11 + $0x20] sm:$0xf]
            %v2828 = vld [vmem:[#allocation11 + $0x24] sm:$0xf]
            %v2829 = vld [vmem:[#allocation11 + $0x28] sm:$0xf]
            %v2830 = vld [vmem:[#allocation11 + $0x2c] sm:$0xf]
            %v2831 = vld [vmem:[#allocation11 + $0x30] sm:$0xf]
            %v2832 = vld [vmem:[#allocation11 + $0x34] sm:$0xf]
            %v2833 = vld [vmem:[#allocation11 + $0x38] sm:$0xf]
            %v2834 = vld [vmem:[#allocation11 + $0x3c] sm:$0xf]
            %v2835 = vld [vmem:[#allocation11 + $0x40] sm:$0xf]
            %v2836 = vld [vmem:[#allocation11 + $0x44] sm:$0xf]
            %v2837 = vld [vmem:[#allocation11 + $0x48] sm:$0xf]
            %v2838 = vld [vmem:[#allocation11 + $0x4c] sm:$0xf]
            %v2839 = vld [vmem:[#allocation11 + $0x50] sm:$0xf]
            %v2840 = vld [vmem:[#allocation11 + $0x54] sm:$0xf]
            %v2841 = vld [vmem:[#allocation11 + $0x58] sm:$0xf]
            %v2842 = vld [vmem:[#allocation11 + $0x5c] sm:$0xf]
            %v2843 = vld [vmem:[#allocation11 + $0x60] sm:$0xf]
            %v2844 = vld [vmem:[#allocation11 + $0x64] sm:$0xf]
            %v2845 = vld [vmem:[#allocation11 + $0x68] sm:$0xf]
            %v2846 = vld [vmem:[#allocation11 + $0x6c] sm:$0xf]
            %v2847 = vld [vmem:[#allocation11 + $0x70] sm:$0xf]
            %v2848 = vld [vmem:[#allocation11 + $0x74] sm:$0xf]
            %v2849 = vld [vmem:[#allocation11 + $0x78] sm:$0xf]
            %v2850 = vld [vmem:[#allocation11 + $0x7c] sm:$0xf]
            %v2883 = vunpack.c.l.b16 %v2819
            %v2884 = vunpack.c.l.b16 %v2820
            %v2885 = vunpack.c.l.b16 %v2821
            %v2886 = vunpack.c.l.b16 %v2822
            %v2887 = vunpack.c.l.b16 %v2823
            %v2888 = vunpack.c.l.b16 %v2824
            %v2889 = vunpack.c.l.b16 %v2825
            %v2890 = vunpack.c.l.b16 %v2826
            %v2891 = vunpack.c.l.b16 %v2827
            %v2892 = vunpack.c.l.b16 %v2828
            %v2893 = vunpack.c.l.b16 %v2829
            %v2894 = vunpack.c.l.b16 %v2830
            %v2895 = vunpack.c.l.b16 %v2831
            %v2896 = vunpack.c.l.b16 %v2832
            %v2897 = vunpack.c.l.b16 %v2833
            %v2898 = vunpack.c.l.b16 %v2834
            %v2899 = vunpack.c.l.b16 %v2835
            %v2900 = vunpack.c.l.b16 %v2836
            %v2901 = vunpack.c.l.b16 %v2837
            %v2902 = vunpack.c.l.b16 %v2838
            %v2903 = vunpack.c.l.b16 %v2839
            %v2904 = vunpack.c.l.b16 %v2840
            %v2905 = vunpack.c.l.b16 %v2841
            %v2906 = vunpack.c.l.b16 %v2842
            %v2907 = vunpack.c.l.b16 %v2843
            %v2908 = vunpack.c.l.b16 %v2844
            %v2909 = vunpack.c.l.b16 %v2845
            %v2910 = vunpack.c.l.b16 %v2846
            %v2911 = vunpack.c.l.b16 %v2847
            %v2912 = vunpack.c.l.b16 %v2848
            %v2913 = vunpack.c.l.b16 %v2849
            %v2914 = vunpack.c.l.b16 %v2850
            %v2915 = vpack.c.b16 %v2884, %v2883
            %v2916 = vpack.c.b16 %v2886, %v2885
            %v2917 = vpack.c.b16 %v2888, %v2887
            %v2918 = vpack.c.b16 %v2890, %v2889
            %v2919 = vpack.c.b16 %v2892, %v2891
            %v2920 = vpack.c.b16 %v2894, %v2893
            %v2921 = vpack.c.b16 %v2896, %v2895
            %v2922 = vpack.c.b16 %v2898, %v2897
            %v2923 = vpack.c.b16 %v2900, %v2899
            %v2924 = vpack.c.b16 %v2902, %v2901
            %v2925 = vpack.c.b16 %v2904, %v2903
            %v2926 = vpack.c.b16 %v2906, %v2905
            %v2927 = vpack.c.b16 %v2908, %v2907
            %v2928 = vpack.c.b16 %v2910, %v2909
            %v2929 = vpack.c.b16 %v2912, %v2911
            %v2930 = vpack.c.b16 %v2914, %v2913
            %2947 = vmatpush.bf16.msra.mxu0 %v2922
            %2948 = vmatpush.bf16.msra.mxu0 %v2921
            %2949 = vmatpush.bf16.msra.mxu0 %v2920
            %2950 = vmatpush.bf16.msra.mxu0 %v2919
            %2951 = vmatpush.bf16.msra.mxu0 %v2918
            %2952 = vmatpush.bf16.msra.mxu0 %v2917
            %2953 = vmatpush.bf16.msra.mxu0 %v2916
            %2954 = vmatpush.bf16.msra.mxu0 %v2915
            %2955 = vmatmul.bf16.gmra.mxu0 %v2817
            %v2956 = vpop.f32.mrf.mxu0
            %v2957 = vadd.f32 0.0, %v2956
            %v2958 = vpop.f32.mrf.mxu0
            %2959 = vdwg.mxu0
            %2960 = vmatpush.bf16.msra.mxu0 %v2930
            %2961 = vmatpush.bf16.msra.mxu0 %v2929
            %2962 = vmatpush.bf16.msra.mxu0 %v2928
            %2963 = vmatpush.bf16.msra.mxu0 %v2927
            %2964 = vmatpush.bf16.msra.mxu0 %v2926
            %2965 = vmatpush.bf16.msra.mxu0 %v2925
            %2966 = vmatpush.bf16.msra.mxu0 %v2924
            %2967 = vmatpush.bf16.msra.mxu0 %v2923
            %2968 = vmatmul.bf16.gmra.mxu0 %v2818
            %v2969 = vpop.f32.mrf.mxu0
            %v2970 = vadd.f32 %v2957, %v2969
            %v2971 = vpop.f32.mrf.mxu0
            %2972 = vdwg.mxu0
            %2973 = vst [vmem:[#allocation12] sm:$0x3] %v2970
          $region60: #{tpu_custom_call.1} parent=55 // pred_fallthru
            _
        $region56: #{tpu_custom_call.1} parent=31 // pred_fallthru
          _
        // Predicated region
        $region61: #{tpu_custom_call.1} parent=31 // pred_check
          %p2974 = pneg %p116
        $region62: #{tpu_custom_call.1} parent=31 // pred_check_branch
          %2976 = sbr.rel (%p2974) target = $region64
        $region63: #{tpu_custom_call.1} parent=31 // pred_region
          %2978 = vsyncadd [#allocation8], 0
          %s2980 = sshll.u32 [#allocation12], 4
          %s2981 = int_to_ptr.vmem [resolvable:$true] %s2980
          %s2982 = sshll.u32 %s3, 4
          %s2983 = int_to_ptr.hbm [resolvable:$true] %s2982
          %2985 = dma.vmem_to_hbm [thread:$0]  %s2981, 32, %s2983, [#allocation8]
        $region64: #{tpu_custom_call.1} parent=31 // pred_fallthru
          _
        // Predicated region
        $region65: #{tpu_custom_call.1} parent=31 // pred_check
          %p2986 = pneg %p116
        $region66: #{tpu_custom_call.1} parent=31 // pred_check_branch
          %2988 = sbr.rel (%p2986) target = $region68
        $region67: #{tpu_custom_call.1} parent=31 // pred_region
          %2990 = dma.done [#allocation8], 32
        $region68: #{tpu_custom_call.1} parent=31 // pred_fallthru
          _
      $region32: #{tpu_custom_call.1} parent=5 // pred_fallthru
        _
      %p2991 = scmp.le.s32.totalorder 2, %s14
      // Predicated region
      $region69: #{tpu_custom_call.1} parent=5 // pred_check
        %p2992 = pneg %p2991
      $region70: #{tpu_custom_call.1} parent=5 // pred_check_branch
        %2994 = sbr.rel (%p2992) target = $region72
      $region71: #{tpu_custom_call.1} parent=5 // pred_region
        %s2995 = ssub.s32 %s14, 2
      $region72: #{tpu_custom_call.1} parent=5 // pred_fallthru
        _
    $region6: #{tpu_custom_call.1} parent=1 // loop_footer
      %s18 = sadd.s32 1, %s14
    $region7: #{tpu_custom_call.1} parent=1 // loop_footer_branch
      %13 = sbr.rel target = $region3
    $region8: #{tpu_custom_call.1} parent=1 // loop_exit
      _
    %2996 = vsyncpa [#allocation7], 1
    %s2997 = scalar_lea.sflag [#allocation7], 1
    %2998 = vsyncpa %s2997, 1
    %2999 = vsyncpa [#allocation10], 1
    %3000 = vsyncpa [#allocation8], 1
    %s3001 = scalar_lea.sflag [#allocation8], 1
    %3002 = vsyncpa %s3001, 1

</llo_original>
